<compile_context>
chip_gen: v6e
topology: v6e:2x2x1
jax: 0.10.0
libtpu: 0.0.40
codegen_flags: <defaults>
</compile_context>

<pallas_src>
import functools
import math

import jax
import jax.numpy as jnp
from jax.experimental import pallas as pl
from jax.experimental.pallas import tpu as pltpu

LOG_STD_MIN, LOG_STD_MAX = -20.0, 2.0
HIDDEN = 256          # Mlp hidden sizes are fixed to [256, 256] in the module
DEFAULT_TB = 512      # target batch-tile rows per grid step (multiple of 8)

_LOG2 = math.log(2.0)
_HALF_LOG_2PI = 0.5 * math.log(2.0 * math.pi)


def actor_kernel(obs_ref, noise_ref,
                 w1_ref, b1_ref, w2_ref, b2_ref, w3_ref, b3_ref,
                 act_ref, logp_ref):
    """One (TB, .) batch tile of the full Actor forward (training branch)."""
    cdt = w1_ref.dtype              # bf16 matmul compute dtype
    adim = act_ref.shape[-1]        # real action width (no lane padding)

    # ----- Mlp trunk: bf16 matmuls on the MXU, f32 accum + f32 bias/ReLU ----
    x = obs_ref[...].astype(cdt)    # cast in-kernel; obs DMA'd as narrow f32
    h1 = jnp.dot(x, w1_ref[...], preferred_element_type=jnp.float32)
    h1 = jnp.maximum(h1 + b1_ref[...], 0.0).astype(cdt)
    h2 = jnp.dot(h1, w2_ref[...], preferred_element_type=jnp.float32)
    h2 = jnp.maximum(h2 + b2_ref[...], 0.0).astype(cdt)

    # ----- fused head: one (256, 2*adim) matmul, then lane slices -----------
    head = jnp.dot(h2, w3_ref[...], preferred_element_type=jnp.float32)
    head = head + b3_ref[...]
    mean = head[:, :adim]
    log_std = jnp.clip(head[:, adim:], LOG_STD_MIN, LOG_STD_MAX)
    std = jnp.exp(log_std)

    # ----- TanhNormal.rsample (standard-normal noise sampled outside) -------
    noise = noise_ref[...]
    pre_tanh = mean + std * noise
    action = jnp.tanh(pre_tanh)

    # ----- TanhNormal.log_prob(pre_tanh) -------------------------------------
    # Normal.log_prob: z = (pre_tanh - mean) / std == noise exactly.
    # log-det: 2log2 + logsigmoid(2x) + logsigmoid(-2x)
    #        = 2*(log2 - x - softplus(-2x))          (one transcendental)
    log_det = 2.0 * (_LOG2 - pre_tanh - jax.nn.softplus(-2.0 * pre_tanh))
    normal_lp = -0.5 * noise * noise - log_std - _HALF_LOG_2PI
    lp = normal_lp - log_det

    # Narrow, unpadded stores: (TB, adim) action and a (TB, 1) log_prob column.
    act_ref[...] = action
    logp_ref[...] = jnp.sum(lp, axis=1, keepdims=True)


def pack_actor_params(params):
    """One-time pack of Actor params into kernel layout (do NOT call per step):
    bf16 weights (MXU fast path, half the weight DMA), f32 (1, N) biases."""
    w1, b1, w2, b2, w3, b3 = params
    cdt = jnp.bfloat16
    as_bias = lambda b: jnp.asarray(b, jnp.float32).reshape(1, -1)
    return (w1.astype(cdt), as_bias(b1),
            w2.astype(cdt), as_bias(b2),
            w3.astype(cdt), as_bias(b3))


def _pick_tb(batch, block_b):
    """Batch-tile rows: multiple of 8, capped by block_b, and >= 2 tiles when
    the batch allows it so both v7x TensorCores get work."""
    n_tiles = max(1, -(-batch // block_b))
    if n_tiles == 1 and batch > 8:
        n_tiles = 2
    tb = -(-batch // n_tiles)
    return max(8, (tb + 7) // 8 * 8)


@functools.partial(jax.jit, static_argnames=("block_b",))
def actor_forward(obs, noise, packed_params, *, block_b=DEFAULT_TB):
    """Training-mode Actor.forward: returns (action, log_prob)."""
    w1, b1, w2, b2, w3, b3 = packed_params
    B, state_dim = obs.shape
    action_dim = noise.shape[1]

    tb = _pick_tb(B, block_b)
    n_tiles = -(-B // tb)
    B_pad = n_tiles * tb
    if B_pad != B:                   # ragged last tile only; usually a no-op
        obs = jnp.pad(obs, ((0, B_pad - B), (0, 0)))
        noise = jnp.pad(noise, ((0, B_pad - B), (0, 0)))

    def row_spec(cols):
        return pl.BlockSpec((tb, cols), lambda i: (i, 0))

    def const_spec(arr):             # whole-array block, VMEM-resident weights
        return pl.BlockSpec(arr.shape, lambda i: (0, 0))

    action, log_prob = pl.pallas_call(
        actor_kernel,
        out_shape=(jax.ShapeDtypeStruct((B_pad, action_dim), jnp.float32),
                   jax.ShapeDtypeStruct((B_pad, 1), jnp.float32)),
        grid=(n_tiles,),
        in_specs=[row_spec(state_dim), row_spec(action_dim),
                  const_spec(w1), const_spec(b1),
                  const_spec(w2), const_spec(b2),
                  const_spec(w3), const_spec(b3)],
        out_specs=(row_spec(action_dim), row_spec(1)),
        compiler_params=pltpu.CompilerParams(
            dimension_semantics=("parallel",)),  # batch tiles shard on v7x 2 TCs
    )(obs, noise, w1, b1, w2, b2, w3, b3)

    if B_pad != B:
        action, log_prob = action[:B], log_prob[:B]
    return action, log_prob


def init_linear(key, in_features, out_features):
    """PyTorch nn.Linear default init: U(-1/sqrt(fan_in), 1/sqrt(fan_in))."""
    kw, kb = jax.random.split(key)
    bound = 1.0 / math.sqrt(in_features)
    # Stored as (in, out) so the kernel does x @ W (== x @ W_pt.T).
    w = jax.random.uniform(kw, (in_features, out_features), jnp.float32,
                           minval=-bound, maxval=bound)
    b = jax.random.uniform(kb, (1, out_features), jnp.float32,
                           minval=-bound, maxval=bound)
    return w, b


if __name__ == "__main__":
    B = 256          # two batch tiles of 128 -> exercises the grid / megacore
    STATE_DIM = 16
    ACTION_DIM = 8

    key = jax.random.PRNGKey(0)
    k_obs, k_noise, k1, k2, k3 = jax.random.split(key, 5)

    obs = jax.random.normal(k_obs, (B, STATE_DIM), jnp.float32)
    noise = jax.random.normal(k_noise, (B, ACTION_DIM), jnp.float32)

    w1, b1 = init_linear(k1, STATE_DIM, HIDDEN)
    w2, b2 = init_linear(k2, HIDDEN, HIDDEN)
    w3, b3 = init_linear(k3, HIDDEN, 2 * ACTION_DIM)
    params = (w1, b1, w2, b2, w3, b3)

    packed = pack_actor_params(params)              # one-time pre-pack
    action, log_prob = actor_forward(obs, noise, packed)
    jax.block_until_ready((action, log_prob))

    # Pure-JAX reference of the same math (mirrors the bf16 matmul operands,
    # but uses the original logsigmoid/divide formulation of the module).
    bf = jnp.bfloat16
    h1 = jnp.maximum(
        jnp.dot(obs.astype(bf), w1.astype(bf),
                preferred_element_type=jnp.float32) + b1, 0.0)
    h2 = jnp.maximum(
        jnp.dot(h1.astype(bf), w2.astype(bf),
                preferred_element_type=jnp.float32) + b2, 0.0)
    out = jnp.dot(h2.astype(bf), w3.astype(bf),
                  preferred_element_type=jnp.float32) + b3
    mean_r = out[:, :ACTION_DIM]
    log_std_r = jnp.clip(out[:, ACTION_DIM:], -20.0, 2.0)
    std_r = jnp.exp(log_std_r)
    pre_r = mean_r + std_r * noise
    act_r = jnp.tanh(pre_r)
    log_det_r = (2.0 * jnp.log(2.0) + jax.nn.log_sigmoid(2.0 * pre_r)
                 + jax.nn.log_sigmoid(-2.0 * pre_r))
    zr = (pre_r - mean_r) / std_r
    lp_r = jnp.sum(-0.5 * zr * zr - log_std_r - 0.5 * jnp.log(2.0 * jnp.pi)
                   - log_det_r, axis=1, keepdims=True)

    assert action.shape == (B, ACTION_DIM) and log_prob.shape == (B, 1)
    assert jnp.allclose(action, act_r, atol=5e-3), "action mismatch"
    assert jnp.allclose(log_prob, lp_r, atol=5e-2), "log_prob mismatch"

    print("KERNEL_OK")
</pallas_src>

<mosaic_0001>
module attributes {stable_mosaic.version = 11 : i64} {
  func.func @actor_kernel(%arg0: i32, %arg1: memref<128x16xf32, #tpu.memory_space<vmem>>, %arg2: memref<128x8xf32, #tpu.memory_space<vmem>>, %arg3: memref<16x256xbf16, #tpu.memory_space<vmem>>, %arg4: memref<1x256xf32, #tpu.memory_space<vmem>>, %arg5: memref<256x256xbf16, #tpu.memory_space<vmem>>, %arg6: memref<1x256xf32, #tpu.memory_space<vmem>>, %arg7: memref<256x16xbf16, #tpu.memory_space<vmem>>, %arg8: memref<1x16xf32, #tpu.memory_space<vmem>>, %arg9: memref<128x8xf32, #tpu.memory_space<vmem>>, %arg10: memref<128x1xf32, #tpu.memory_space<vmem>>) attributes {dimension_semantics = [#tpu.dimension_semantics<parallel>], iteration_bounds = array<i64: 2>, scalar_prefetch = 0 : i64, scratch_operands = 0 : i64, tpu.core_type = #tpu.core_type<tc>, window_params = [{transform_indices = @transform_0, window_bounds = array<i64: 128, 16>}, {transform_indices = @transform_1, window_bounds = array<i64: 128, 8>}, {pipeline_mode = #tpu.pipeline_mode<synchronous>, transform_indices = @transform_2, window_bounds = array<i64: 16, 256>}, {pipeline_mode = #tpu.pipeline_mode<synchronous>, transform_indices = @transform_3, window_bounds = array<i64: 1, 256>}, {pipeline_mode = #tpu.pipeline_mode<synchronous>, transform_indices = @transform_4, window_bounds = array<i64: 256, 256>}, {pipeline_mode = #tpu.pipeline_mode<synchronous>, transform_indices = @transform_5, window_bounds = array<i64: 1, 256>}, {pipeline_mode = #tpu.pipeline_mode<synchronous>, transform_indices = @transform_6, window_bounds = array<i64: 256, 16>}, {pipeline_mode = #tpu.pipeline_mode<synchronous>, transform_indices = @transform_7, window_bounds = array<i64: 1, 16>}, {transform_indices = @transform_8, window_bounds = array<i64: 128, 8>}, {transform_indices = @transform_9, window_bounds = array<i64: 128, 1>}]} {
    %c0 = arith.constant 0 : index
    %c0_0 = arith.constant 0 : index
    %0 = vector.load %arg1[%c0, %c0_0] : memref<128x16xf32, #tpu.memory_space<vmem>>, vector<128x16xf32>
    %1 = arith.truncf %0 : vector<128x16xf32> to vector<128x16xbf16>
    %c0_1 = arith.constant 0 : index
    %c0_2 = arith.constant 0 : index
    %2 = vector.load %arg3[%c0_1, %c0_2] : memref<16x256xbf16, #tpu.memory_space<vmem>>, vector<16x256xbf16>
    %cst = arith.constant dense<0.000000e+00> : vector<128x256xf32>
    %3 = tpu.matmul %1, %2, %cst {dimension_numbers = #tpu.dot_dimension_numbers<[1], [0], [0], [1], [0, 0, 1, 1], [], []>} : vector<128x16xbf16>, vector<16x256xbf16>, vector<128x256xf32> -> vector<128x256xf32>
    %c0_3 = arith.constant 0 : index
    %c0_4 = arith.constant 0 : index
    %4 = vector.load %arg4[%c0_3, %c0_4] : memref<1x256xf32, #tpu.memory_space<vmem>>, vector<1x256xf32>
    %5 = vector.broadcast %4 : vector<1x256xf32> to vector<128x256xf32>
    %6 = arith.addf %3, %5 : vector<128x256xf32>
    %cst_5 = arith.constant 0.000000e+00 : f32
    %7 = vector.broadcast %cst_5 : f32 to vector<128x256xf32>
    %8 = arith.maximumf %6, %7 : vector<128x256xf32>
    %9 = arith.truncf %8 : vector<128x256xf32> to vector<128x256xbf16>
    %c0_6 = arith.constant 0 : index
    %c0_7 = arith.constant 0 : index
    %10 = vector.load %arg5[%c0_6, %c0_7] : memref<256x256xbf16, #tpu.memory_space<vmem>>, vector<256x256xbf16>
    %cst_8 = arith.constant dense<0.000000e+00> : vector<128x256xf32>
    %11 = tpu.matmul %9, %10, %cst_8 {dimension_numbers = #tpu.dot_dimension_numbers<[1], [0], [0], [1], [0, 0, 1, 1], [], []>} : vector<128x256xbf16>, vector<256x256xbf16>, vector<128x256xf32> -> vector<128x256xf32>
    %c0_9 = arith.constant 0 : index
    %c0_10 = arith.constant 0 : index
    %12 = vector.load %arg6[%c0_9, %c0_10] : memref<1x256xf32, #tpu.memory_space<vmem>>, vector<1x256xf32>
    %13 = vector.broadcast %12 : vector<1x256xf32> to vector<128x256xf32>
    %14 = arith.addf %11, %13 : vector<128x256xf32>
    %cst_11 = arith.constant 0.000000e+00 : f32
    %15 = vector.broadcast %cst_11 : f32 to vector<128x256xf32>
    %16 = arith.maximumf %14, %15 : vector<128x256xf32>
    %17 = arith.truncf %16 : vector<128x256xf32> to vector<128x256xbf16>
    %c0_12 = arith.constant 0 : index
    %c0_13 = arith.constant 0 : index
    %18 = vector.load %arg7[%c0_12, %c0_13] : memref<256x16xbf16, #tpu.memory_space<vmem>>, vector<256x16xbf16>
    %cst_14 = arith.constant dense<0.000000e+00> : vector<128x16xf32>
    %19 = tpu.matmul %17, %18, %cst_14 {dimension_numbers = #tpu.dot_dimension_numbers<[1], [0], [0], [1], [0, 0, 1, 1], [], []>} : vector<128x256xbf16>, vector<256x16xbf16>, vector<128x16xf32> -> vector<128x16xf32>
    %c0_15 = arith.constant 0 : index
    %c0_16 = arith.constant 0 : index
    %20 = vector.load %arg8[%c0_15, %c0_16] : memref<1x16xf32, #tpu.memory_space<vmem>>, vector<1x16xf32>
    %21 = vector.broadcast %20 : vector<1x16xf32> to vector<128x16xf32>
    %22 = arith.addf %19, %21 : vector<128x16xf32>
    %23 = vector.extract_strided_slice %22 {offsets = [0, 0], sizes = [128, 8], strides = [1, 1]} : vector<128x16xf32> to vector<128x8xf32>
    %24 = vector.extract_strided_slice %22 {offsets = [0, 8], sizes = [128, 8], strides = [1, 1]} : vector<128x16xf32> to vector<128x8xf32>
    %cst_17 = arith.constant -2.000000e+01 : f32
    %cst_18 = arith.constant 2.000000e+00 : f32
    %25 = vector.broadcast %cst_17 : f32 to vector<128x8xf32>
    %26 = arith.maximumf %25, %24 : vector<128x8xf32>
    %27 = vector.broadcast %cst_18 : f32 to vector<128x8xf32>
    %28 = arith.minimumf %27, %26 : vector<128x8xf32>
    %29 = math.exp %28 : vector<128x8xf32>
    %c0_19 = arith.constant 0 : index
    %c0_20 = arith.constant 0 : index
    %30 = vector.load %arg2[%c0_19, %c0_20] : memref<128x8xf32, #tpu.memory_space<vmem>>, vector<128x8xf32>
    %31 = arith.mulf %29, %30 : vector<128x8xf32>
    %32 = arith.addf %23, %31 : vector<128x8xf32>
    %33 = math.tanh %32 : vector<128x8xf32>
    %cst_21 = arith.constant 0.693147182 : f32
    %34 = vector.broadcast %cst_21 : f32 to vector<128x8xf32>
    %35 = arith.subf %34, %32 : vector<128x8xf32>
    %cst_22 = arith.constant -2.000000e+00 : f32
    %36 = vector.broadcast %cst_22 : f32 to vector<128x8xf32>
    %37 = arith.mulf %36, %32 : vector<128x8xf32>
    %cst_23 = arith.constant 0.000000e+00 : f32
    %38 = vector.broadcast %cst_23 : f32 to vector<128x8xf32>
    %39 = arith.maximumf %37, %38 : vector<128x8xf32>
    %40 = vector.broadcast %cst_23 : f32 to vector<128x8xf32>
    %41 = arith.subf %37, %40 : vector<128x8xf32>
    %42 = arith.cmpf one, %41, %41 : vector<128x8xf32>
    %43 = vector.broadcast %cst_23 : f32 to vector<128x8xf32>
    %44 = arith.addf %37, %43 : vector<128x8xf32>
    %45 = math.absf %41 : vector<128x8xf32>
    %cst_24 = arith.constant 0.000000e+00 : f32
    %46 = vector.broadcast %cst_24 : f32 to vector<128x8xf32>
    %47 = arith.subf %46, %45 : vector<128x8xf32>
    %48 = math.exp %47 : vector<128x8xf32>
    %49 = math.log1p %48 : vector<128x8xf32>
    %50 = arith.addf %39, %49 : vector<128x8xf32>
    %51 = arith.select %42, %44, %50 : vector<128x8xi1>, vector<128x8xf32>
    %52 = arith.subf %35, %51 : vector<128x8xf32>
    %cst_25 = arith.constant 2.000000e+00 : f32
    %53 = vector.broadcast %cst_25 : f32 to vector<128x8xf32>
    %54 = arith.mulf %53, %52 : vector<128x8xf32>
    %cst_26 = arith.constant -5.000000e-01 : f32
    %55 = vector.broadcast %cst_26 : f32 to vector<128x8xf32>
    %56 = arith.mulf %55, %30 : vector<128x8xf32>
    %57 = arith.mulf %56, %30 : vector<128x8xf32>
    %58 = arith.subf %57, %28 : vector<128x8xf32>
    %cst_27 = arith.constant 0.918938517 : f32
    %59 = vector.broadcast %cst_27 : f32 to vector<128x8xf32>
    %60 = arith.subf %58, %59 : vector<128x8xf32>
    %61 = arith.subf %60, %54 : vector<128x8xf32>
    %c0_28 = arith.constant 0 : index
    %c0_29 = arith.constant 0 : index
    %62 = vector.load %arg9[%c0_28, %c0_29] : memref<128x8xf32, #tpu.memory_space<vmem>>, vector<128x8xf32>
    tpu.vector_store %arg9[%c0_28, %c0_29], %33 {strides = array<i32>} : memref<128x8xf32, #tpu.memory_space<vmem>>, vector<128x8xf32>,
    %cst_30 = arith.constant dense<0.000000e+00> : vector<128xf32>
    %63 = vector.multi_reduction <add>, %61, %cst_30 [1] : vector<128x8xf32> to vector<128xf32>
    %64 = vector.shape_cast %63 : vector<128xf32> to vector<128x1xf32>
    %c0_31 = arith.constant 0 : index
    %c0_32 = arith.constant 0 : index
    %65 = vector.load %arg10[%c0_31, %c0_32] : memref<128x1xf32, #tpu.memory_space<vmem>>, vector<128x1xf32>
    tpu.vector_store %arg10[%c0_31, %c0_32], %64 {strides = array<i32>} : memref<128x1xf32, #tpu.memory_space<vmem>>, vector<128x1xf32>,
    return
  }
  func.func @transform_0(%arg0: i32) -> (i32, i32) {
    %c0_i32 = arith.constant 0 : i32
    %c0_i32_0 = arith.constant 0 : i32
    return %arg0, %c0_i32 : i32, i32
  }
  func.func @transform_1(%arg0: i32) -> (i32, i32) {
    %c0_i32 = arith.constant 0 : i32
    %c0_i32_0 = arith.constant 0 : i32
    return %arg0, %c0_i32 : i32, i32
  }
  func.func @transform_2(%arg0: i32) -> (i32, i32) {
    %c0_i32 = arith.constant 0 : i32
    %c0_i32_0 = arith.constant 0 : i32
    %c0_i32_1 = arith.constant 0 : i32
    return %c0_i32, %c0_i32_0 : i32, i32
  }
  func.func @transform_3(%arg0: i32) -> (i32, i32) {
    %c0_i32 = arith.constant 0 : i32
    %c0_i32_0 = arith.constant 0 : i32
    %c0_i32_1 = arith.constant 0 : i32
    return %c0_i32, %c0_i32_0 : i32, i32
  }
  func.func @transform_4(%arg0: i32) -> (i32, i32) {
    %c0_i32 = arith.constant 0 : i32
    %c0_i32_0 = arith.constant 0 : i32
    %c0_i32_1 = arith.constant 0 : i32
    return %c0_i32, %c0_i32_0 : i32, i32
  }
  func.func @transform_5(%arg0: i32) -> (i32, i32) {
    %c0_i32 = arith.constant 0 : i32
    %c0_i32_0 = arith.constant 0 : i32
    %c0_i32_1 = arith.constant 0 : i32
    return %c0_i32, %c0_i32_0 : i32, i32
  }
  func.func @transform_6(%arg0: i32) -> (i32, i32) {
    %c0_i32 = arith.constant 0 : i32
    %c0_i32_0 = arith.constant 0 : i32
    %c0_i32_1 = arith.constant 0 : i32
    return %c0_i32, %c0_i32_0 : i32, i32
  }
  func.func @transform_7(%arg0: i32) -> (i32, i32) {
    %c0_i32 = arith.constant 0 : i32
    %c0_i32_0 = arith.constant 0 : i32
    %c0_i32_1 = arith.constant 0 : i32
    return %c0_i32, %c0_i32_0 : i32, i32
  }
  func.func @transform_8(%arg0: i32) -> (i32, i32) {
    %c0_i32 = arith.constant 0 : i32
    %c0_i32_0 = arith.constant 0 : i32
    return %arg0, %c0_i32 : i32, i32
  }
  func.func @transform_9(%arg0: i32) -> (i32, i32) {
    %c0_i32 = arith.constant 0 : i32
    %c0_i32_0 = arith.constant 0 : i32
    return %arg0, %c0_i32 : i32, i32
  }
}

</mosaic_0001>

<llo_original>
// kernel: actor_forward.1
$region0: #{actor_forward.1}
  #allocation0 [shape = 'u32[]', space=smem, size = 0x4, offset = 0x4, fixed_abs, tag = 'smem constant byte address 0x4 - core index']
  #allocation1 [shape = 'u32[144,128]{1,0:T(1,128)}', space=vmem, size = 0x12000, scoped, tag = 'internal scratch']
  %s0 = inlined_call_operand.vmem [shape: f32[256,16], index: 0, kind: input, shape index: {}]
  %s1 = inlined_call_operand.vmem [shape: f32[256,8], index: 1, kind: input, shape index: {}]
  %s2 = inlined_call_operand.vmem [shape: bf16[16,256], index: 2, kind: input, shape index: {}]
  %s3 = inlined_call_operand.vmem [shape: f32[1,256], index: 3, kind: input, shape index: {}]
  %s4 = inlined_call_operand.vmem [shape: bf16[256,256], index: 4, kind: input, shape index: {}]
  %s5 = inlined_call_operand.vmem [shape: f32[1,256], index: 5, kind: input, shape index: {}]
  %s6 = inlined_call_operand.vmem [shape: bf16[256,16], index: 6, kind: input, shape index: {}]
  %s7 = inlined_call_operand.vmem [shape: f32[1,16], index: 7, kind: input, shape index: {}]
  %s8 = inlined_call_operand.vmem [shape: f32[256,8], index: 8, kind: output, shape index: {0}]
  %s9 = inlined_call_operand.vmem [shape: f32[256,1], index: 9, kind: output, shape index: {1}]
  %10 = xla_tuple %s8, %s9
  %s11 = sld [smem:[#allocation0]]
  $region73: #{actor_forward.1} parent=0
    _
  %s13 = ssub.s32 1, %s11
  %s14 = scalar_select 0, %s13, %s11
  loop: start=0, step=1, limit=4
  $region2: #{actor_forward.1} parent=0 // loop_pre_header
    _
  $region3: #{actor_forward.1} parent=0 // loop_header
    %s16 = sphi 0, %s20
    %p17 = scmp.ge.s32.totalorder %s16, 4
    %s26 = sphi 0, %s28
    %s29 = sphi 0, %s26
    %s30 = sphi 0, %s29
    %s46 = sphi 0, %s30
    %s52 = sphi 0, %s54
    %s55 = sphi 0, %s52
    %s56 = sphi 0, %s55
    %s72 = sphi 0, %s56
    %s76 = sphi 0, %s76
    %s78 = sphi 0, %s76
    %s79 = sphi 0, %s78
    %s93 = sphi 0, %s79
    %s97 = sphi 0, %s97
    %s99 = sphi 0, %s97
    %s100 = sphi 0, %s99
    %s114 = sphi 0, %s100
    %s118 = sphi 0, %s118
    %s120 = sphi 0, %s118
    %s121 = sphi 0, %s120
    %s135 = sphi 0, %s121
    %s139 = sphi 0, %s139
    %s141 = sphi 0, %s139
    %s142 = sphi 0, %s141
    %s156 = sphi 0, %s142
    %s160 = sphi 0, %s160
    %s162 = sphi 0, %s160
    %s163 = sphi 0, %s162
    %s177 = sphi 0, %s163
    %s181 = sphi 0, %s181
    %s183 = sphi 0, %s181
    %s184 = sphi 0, %s183
    %s198 = sphi 0, %s184
    %s204 = sphi 0, %s206
    %s207 = sphi 0, %s204
    %s208 = sphi 0, %s207
    %s224 = sphi 0, %s208
    %s230 = sphi 0, %s232
    %s233 = sphi 0, %s230
    %s234 = sphi 0, %s233
    %s250 = sphi 0, %s234
  $region4: #{actor_forward.1} parent=0 // loop_header_branch
    %19 = sbr.rel (%p17) target = $region8
  $region5: #{actor_forward.1} parent=0 // loop_body
    %s21 = ssub.s32 %s16, 1
    %s22 = ssub.s32 %s16, 2
    %s23 = sadd.s32 %s16, 1
    %s24 = ssub.s32 %s16, %s23
    %p25 = scmp.eq.s32.totalorder %s24, 0
    %s27 = sadd.s32 %s26, 1
    %s28 = scalar_select %p25, %s26, %s27
    %p31 = pneg %p25
    %p32 = scmp.eq.s32.totalorder %s16, 1
    %p33 = por %p31, %p32
    %p34 = scmp.ne.s32.totalorder %s26, %s29
    %p35 = scmp.eq.s32.totalorder %s16, 0
    %p36 = por %p34, %p35
    %p37 = scmp.ne.s32.totalorder %s26, %s29
    %p38 = scmp.eq.s32.totalorder %s21, 1
    %p39 = por %p37, %p38
    %p40 = scmp.ne.s32.totalorder %s29, %s30
    %p41 = scmp.eq.s32.totalorder %s21, 0
    %p42 = por %p40, %p41
    %p43 = scmp.ne.s32.totalorder %s29, %s30
    %p44 = scmp.eq.s32.totalorder %s22, 1
    %p45 = por %p43, %p44
    %p47 = scmp.ne.s32.totalorder %s30, %s46
    %p48 = scmp.eq.s32.totalorder %s22, 0
    %p49 = por %p47, %p48
    %s50 = ssub.s32 %s16, %s23
    %p51 = scmp.eq.s32.totalorder %s50, 0
    %s53 = sadd.s32 %s52, 1
    %s54 = scalar_select %p51, %s52, %s53
    %p57 = pneg %p51
    %p58 = scmp.eq.s32.totalorder %s16, 1
    %p59 = por %p57, %p58
    %p60 = scmp.ne.s32.totalorder %s52, %s55
    %p61 = scmp.eq.s32.totalorder %s16, 0
    %p62 = por %p60, %p61
    %p63 = scmp.ne.s32.totalorder %s52, %s55
    %p64 = scmp.eq.s32.totalorder %s21, 1
    %p65 = por %p63, %p64
    %p66 = scmp.ne.s32.totalorder %s55, %s56
    %p67 = scmp.eq.s32.totalorder %s21, 0
    %p68 = por %p66, %p67
    %p69 = scmp.ne.s32.totalorder %s55, %s56
    %p70 = scmp.eq.s32.totalorder %s22, 1
    %p71 = por %p69, %p70
    %p73 = scmp.ne.s32.totalorder %s56, %s72
    %p74 = scmp.eq.s32.totalorder %s22, 0
    %p75 = por %p73, %p74
    %s77 = sadd.s32 %s76, 1
    %p80 = scmp.eq.s32.totalorder %s16, 1
    %p81 = scmp.ne.s32.totalorder %s76, %s78
    %p82 = scmp.eq.s32.totalorder %s16, 0
    %p83 = por %p81, %p82
    %p84 = scmp.ne.s32.totalorder %s76, %s78
    %p85 = scmp.eq.s32.totalorder %s21, 1
    %p86 = por %p84, %p85
    %p87 = scmp.ne.s32.totalorder %s78, %s79
    %p88 = scmp.eq.s32.totalorder %s21, 0
    %p89 = por %p87, %p88
    %p90 = scmp.ne.s32.totalorder %s78, %s79
    %p91 = scmp.eq.s32.totalorder %s22, 1
    %p92 = por %p90, %p91
    %p94 = scmp.ne.s32.totalorder %s79, %s93
    %p95 = scmp.eq.s32.totalorder %s22, 0
    %p96 = por %p94, %p95
    %s98 = sadd.s32 %s97, 1
    %p101 = scmp.eq.s32.totalorder %s16, 1
    %p102 = scmp.ne.s32.totalorder %s97, %s99
    %p103 = scmp.eq.s32.totalorder %s16, 0
    %p104 = por %p102, %p103
    %p105 = scmp.ne.s32.totalorder %s97, %s99
    %p106 = scmp.eq.s32.totalorder %s21, 1
    %p107 = por %p105, %p106
    %p108 = scmp.ne.s32.totalorder %s99, %s100
    %p109 = scmp.eq.s32.totalorder %s21, 0
    %p110 = por %p108, %p109
    %p111 = scmp.ne.s32.totalorder %s99, %s100
    %p112 = scmp.eq.s32.totalorder %s22, 1
    %p113 = por %p111, %p112
    %p115 = scmp.ne.s32.totalorder %s100, %s114
    %p116 = scmp.eq.s32.totalorder %s22, 0
    %p117 = por %p115, %p116
    %s119 = sadd.s32 %s118, 1
    %p122 = scmp.eq.s32.totalorder %s16, 1
    %p123 = scmp.ne.s32.totalorder %s118, %s120
    %p124 = scmp.eq.s32.totalorder %s16, 0
    %p125 = por %p123, %p124
    %p126 = scmp.ne.s32.totalorder %s118, %s120
    %p127 = scmp.eq.s32.totalorder %s21, 1
    %p128 = por %p126, %p127
    %p129 = scmp.ne.s32.totalorder %s120, %s121
    %p130 = scmp.eq.s32.totalorder %s21, 0
    %p131 = por %p129, %p130
    %p132 = scmp.ne.s32.totalorder %s120, %s121
    %p133 = scmp.eq.s32.totalorder %s22, 1
    %p134 = por %p132, %p133
    %p136 = scmp.ne.s32.totalorder %s121, %s135
    %p137 = scmp.eq.s32.totalorder %s22, 0
    %p138 = por %p136, %p137
    %s140 = sadd.s32 %s139, 1
    %p143 = scmp.eq.s32.totalorder %s16, 1
    %p144 = scmp.ne.s32.totalorder %s139, %s141
    %p145 = scmp.eq.s32.totalorder %s16, 0
    %p146 = por %p144, %p145
    %p147 = scmp.ne.s32.totalorder %s139, %s141
    %p148 = scmp.eq.s32.totalorder %s21, 1
    %p149 = por %p147, %p148
    %p150 = scmp.ne.s32.totalorder %s141, %s142
    %p151 = scmp.eq.s32.totalorder %s21, 0
    %p152 = por %p150, %p151
    %p153 = scmp.ne.s32.totalorder %s141, %s142
    %p154 = scmp.eq.s32.totalorder %s22, 1
    %p155 = por %p153, %p154
    %p157 = scmp.ne.s32.totalorder %s142, %s156
    %p158 = scmp.eq.s32.totalorder %s22, 0
    %p159 = por %p157, %p158
    %s161 = sadd.s32 %s160, 1
    %p164 = scmp.eq.s32.totalorder %s16, 1
    %p165 = scmp.ne.s32.totalorder %s160, %s162
    %p166 = scmp.eq.s32.totalorder %s16, 0
    %p167 = por %p165, %p166
    %p168 = scmp.ne.s32.totalorder %s160, %s162
    %p169 = scmp.eq.s32.totalorder %s21, 1
    %p170 = por %p168, %p169
    %p171 = scmp.ne.s32.totalorder %s162, %s163
    %p172 = scmp.eq.s32.totalorder %s21, 0
    %p173 = por %p171, %p172
    %p174 = scmp.ne.s32.totalorder %s162, %s163
    %p175 = scmp.eq.s32.totalorder %s22, 1
    %p176 = por %p174, %p175
    %p178 = scmp.ne.s32.totalorder %s163, %s177
    %p179 = scmp.eq.s32.totalorder %s22, 0
    %p180 = por %p178, %p179
    %s182 = sadd.s32 %s181, 1
    %p185 = scmp.eq.s32.totalorder %s16, 1
    %p186 = scmp.ne.s32.totalorder %s181, %s183
    %p187 = scmp.eq.s32.totalorder %s16, 0
    %p188 = por %p186, %p187
    %p189 = scmp.ne.s32.totalorder %s181, %s183
    %p190 = scmp.eq.s32.totalorder %s21, 1
    %p191 = por %p189, %p190
    %p192 = scmp.ne.s32.totalorder %s183, %s184
    %p193 = scmp.eq.s32.totalorder %s21, 0
    %p194 = por %p192, %p193
    %p195 = scmp.ne.s32.totalorder %s183, %s184
    %p196 = scmp.eq.s32.totalorder %s22, 1
    %p197 = por %p195, %p196
    %p199 = scmp.ne.s32.totalorder %s184, %s198
    %p200 = scmp.eq.s32.totalorder %s22, 0
    %p201 = por %p199, %p200
    %s202 = ssub.s32 %s16, %s23
    %p203 = scmp.eq.s32.totalorder %s202, 0
    %s205 = sadd.s32 %s204, 1
    %s206 = scalar_select %p203, %s204, %s205
    %p209 = pneg %p203
    %p210 = scmp.eq.s32.totalorder %s16, 1
    %p211 = por %p209, %p210
    %p212 = scmp.ne.s32.totalorder %s204, %s207
    %p213 = scmp.eq.s32.totalorder %s16, 0
    %p214 = por %p212, %p213
    %p215 = scmp.ne.s32.totalorder %s204, %s207
    %p216 = scmp.eq.s32.totalorder %s21, 1
    %p217 = por %p215, %p216
    %p218 = scmp.ne.s32.totalorder %s207, %s208
    %p219 = scmp.eq.s32.totalorder %s21, 0
    %p220 = por %p218, %p219
    %p221 = scmp.ne.s32.totalorder %s207, %s208
    %p222 = scmp.eq.s32.totalorder %s22, 1
    %p223 = por %p221, %p222
    %p225 = scmp.ne.s32.totalorder %s208, %s224
    %p226 = scmp.eq.s32.totalorder %s22, 0
    %p227 = por %p225, %p226
    %s228 = ssub.s32 %s16, %s23
    %p229 = scmp.eq.s32.totalorder %s228, 0
    %s231 = sadd.s32 %s230, 1
    %s232 = scalar_select %p229, %s230, %s231
    %p235 = pneg %p229
    %p236 = scmp.eq.s32.totalorder %s16, 1
    %p237 = por %p235, %p236
    %p238 = scmp.ne.s32.totalorder %s230, %s233
    %p239 = scmp.eq.s32.totalorder %s16, 0
    %p240 = por %p238, %p239
    %p241 = scmp.ne.s32.totalorder %s230, %s233
    %p242 = scmp.eq.s32.totalorder %s21, 1
    %p243 = por %p241, %p242
    %p244 = scmp.ne.s32.totalorder %s233, %s234
    %p245 = scmp.eq.s32.totalorder %s21, 0
    %p246 = por %p244, %p245
    %p247 = scmp.ne.s32.totalorder %s233, %s234
    %p248 = scmp.eq.s32.totalorder %s22, 1
    %p249 = por %p247, %p248
    %p251 = scmp.ne.s32.totalorder %s234, %s250
    %p252 = scmp.eq.s32.totalorder %s22, 0
    %p253 = por %p251, %p252
    %p254 = scmp.le.s32.totalorder 1, %s16
    %p255 = scmp.lt.s32.totalorder %s16, 3
    %p256 = pnand %p254, %p255
    %p257 = pneg %p256
    // Predicated region
    $region9: #{actor_forward.1} parent=5 // pred_check
      _
    $region10: #{actor_forward.1} parent=5 // pred_check_branch
      %259 = sbr.rel (%p256) target = $region12
    $region11: #{actor_forward.1} parent=5 // pred_region
      %s260 = ssub.s32 %s16, 1
      // Predicated region
      $region13: #{actor_forward.1} parent=11 // pred_check
        %p261 = pneg %p89
      $region14: #{actor_forward.1} parent=11 // pred_check_branch
        %263 = sbr.rel (%p261) target = $region16
      $region15: #{actor_forward.1} parent=11 // pred_region
        _
      $region16: #{actor_forward.1} parent=11 // pred_fallthru
        _
      // Predicated region
      $region17: #{actor_forward.1} parent=11 // pred_check
        %p264 = pneg %p110
      $region18: #{actor_forward.1} parent=11 // pred_check_branch
        %266 = sbr.rel (%p264) target = $region20
      $region19: #{actor_forward.1} parent=11 // pred_region
        _
      $region20: #{actor_forward.1} parent=11 // pred_fallthru
        _
      // Predicated region
      $region21: #{actor_forward.1} parent=11 // pred_check
        %p267 = pneg %p131
      $region22: #{actor_forward.1} parent=11 // pred_check_branch
        %269 = sbr.rel (%p267) target = $region24
      $region23: #{actor_forward.1} parent=11 // pred_region
        _
      $region24: #{actor_forward.1} parent=11 // pred_fallthru
        _
      // Predicated region
      $region25: #{actor_forward.1} parent=11 // pred_check
        %p270 = pneg %p152
      $region26: #{actor_forward.1} parent=11 // pred_check_branch
        %272 = sbr.rel (%p270) target = $region28
      $region27: #{actor_forward.1} parent=11 // pred_region
        _
      $region28: #{actor_forward.1} parent=11 // pred_fallthru
        _
      // Predicated region
      $region29: #{actor_forward.1} parent=11 // pred_check
        %p273 = pneg %p173
      $region30: #{actor_forward.1} parent=11 // pred_check_branch
        %275 = sbr.rel (%p273) target = $region32
      $region31: #{actor_forward.1} parent=11 // pred_region
        _
      $region32: #{actor_forward.1} parent=11 // pred_fallthru
        _
      // Predicated region
      $region33: #{actor_forward.1} parent=11 // pred_check
        %p276 = pneg %p194
      $region34: #{actor_forward.1} parent=11 // pred_check_branch
        %278 = sbr.rel (%p276) target = $region36
      $region35: #{actor_forward.1} parent=11 // pred_region
        _
      $region36: #{actor_forward.1} parent=11 // pred_fallthru
        _
    $region12: #{actor_forward.1} parent=5 // pred_fallthru
      _
    %p279 = scmp.lt.s32.totalorder %s16, 2
    // Predicated region
    $region37: #{actor_forward.1} parent=5 // pred_check
      %p280 = pneg %p279
    $region38: #{actor_forward.1} parent=5 // pred_check_branch
      %282 = sbr.rel (%p280) target = $region40
    $region39: #{actor_forward.1} parent=5 // pred_region
      // Predicated region
      $region41: #{actor_forward.1} parent=39 // pred_check
        %p283 = pneg %p36
      $region42: #{actor_forward.1} parent=39 // pred_check_branch
        %285 = sbr.rel (%p283) target = $region44
      $region43: #{actor_forward.1} parent=39 // pred_region
        %s286 = smul.u32 16, %s16
        %p287 = scmp.lt.s32.totalorder %s286, 31
        %s288 = scalar_select %p287, %s286, 31
        %s289 = smul.addr %s288, 8
        %s290 = scalar_lea.vmem %s0, %s289
        %s291 = smul.u32 16, %s16
      $region44: #{actor_forward.1} parent=39 // pred_fallthru
        _
      // Predicated region
      $region45: #{actor_forward.1} parent=39 // pred_check
        %p292 = pneg %p62
      $region46: #{actor_forward.1} parent=39 // pred_check_branch
        %294 = sbr.rel (%p292) target = $region48
      $region47: #{actor_forward.1} parent=39 // pred_region
        %s295 = smul.u32 16, %s16
        %p296 = scmp.lt.s32.totalorder %s295, 31
        %s297 = scalar_select %p296, %s295, 31
        %s298 = smul.addr %s297, 8
        %s299 = scalar_lea.vmem %s1, %s298
        %s300 = smul.u32 16, %s16
      $region48: #{actor_forward.1} parent=39 // pred_fallthru
        _
    $region40: #{actor_forward.1} parent=5 // pred_fallthru
      _
    %p301 = scmp.le.s32.totalorder 1, %s16
    %p302 = scmp.lt.s32.totalorder %s16, 3
    %p303 = pnand %p301, %p302
    %p304 = pneg %p303
    // Predicated region
    $region49: #{actor_forward.1} parent=5 // pred_check
      _
    $region50: #{actor_forward.1} parent=5 // pred_check_branch
      %306 = sbr.rel (%p303) target = $region52
    $region51: #{actor_forward.1} parent=5 // pred_region
      %s307 = ssub.s32 %s16, 1
      %s308 = smul.u32 16, %s21
      %p309 = scmp.lt.s32.totalorder %s308, 31
      %s310 = scalar_select %p309, %s308, 31
      %s311 = smul.addr %s310, 8
      %s312 = scalar_lea.vmem %s0, %s311
      %p313 = pneg %p42
      %p314 = pneg %p39
      %s315 = smul.u32 16, %s21
      %p316 = scmp.lt.s32.totalorder %s315, 31
      %s317 = scalar_select %p316, %s315, 31
      %s318 = smul.addr %s317, 8
      %s319 = scalar_lea.vmem %s1, %s318
      %p320 = pneg %p68
      %p321 = pneg %p65
      %p322 = pneg %p89
      %p323 = pneg %p86
      %p324 = pneg %p110
      %p325 = pneg %p107
      %p326 = pneg %p131
      %p327 = pneg %p128
      %p328 = pneg %p152
      %p329 = pneg %p149
      %p330 = pneg %p173
      %p331 = pneg %p170
      %p332 = pneg %p194
      %p333 = pneg %p191
      %p334 = pneg %p220
      %p335 = pneg %p217
      %s336 = smul.u32 16, %s21
      %p337 = scmp.lt.s32.totalorder %s336, 31
      %s338 = scalar_select %p337, %s336, 31
      %s339 = smul.addr %s338, 8
      %s340 = scalar_lea.vmem %s8, %s339
      %p341 = pneg %p246
      %p342 = pneg %p243
      %s343 = smul.u32 16, %s21
      %p344 = scmp.lt.s32.totalorder %s343, 31
      %s345 = scalar_select %p344, %s343, 31
      %s346 = smul.addr %s345, 8
      %s347 = scalar_lea.vmem %s9, %s346
      %s348 = smul.u32 16, %s21
      %p349 = scmp.lt.s32.totalorder %s348, 31
      %s350 = scalar_select %p349, %s348, 31
      %s351 = smul.addr %s350, 8
      %s352 = scalar_lea.vmem %s0, %s351
      %s353 = smul.u32 16, %s21
      %s354 = smul.u32 16, %s21
      %p355 = scmp.lt.s32.totalorder %s354, 31
      %s356 = scalar_select %p355, %s354, 31
      %s357 = smul.addr %s356, 8
      %s358 = scalar_lea.vmem %s1, %s357
      %s359 = smul.u32 16, %s21
      %s360 = smul.u32 16, %s21
      %p361 = scmp.lt.s32.totalorder %s360, 31
      %s362 = scalar_select %p361, %s360, 31
      %s363 = smul.addr %s362, 8
      %s364 = scalar_lea.vmem %s8, %s363
      %s365 = smul.u32 16, %s21
      %s366 = smul.u32 16, %s21
      %p367 = scmp.lt.s32.totalorder %s366, 31
      %s368 = scalar_select %p367, %s366, 31
      %s369 = smul.addr %s368, 8
      %s370 = scalar_lea.vmem %s9, %s369
      %s371 = smul.u32 16, %s21
      %v373 = vld [vmem:[%s352] sm:$0xff]
      %v374 = vld [vmem:[%s352 + $0x8] sm:$0xff]
      %v375 = vld [vmem:[%s352 + $0x10] sm:$0xff]
      %v376 = vld [vmem:[%s352 + $0x18] sm:$0xff]
      %v377 = vld [vmem:[%s352 + $0x20] sm:$0xff]
      %v378 = vld [vmem:[%s352 + $0x28] sm:$0xff]
      %v379 = vld [vmem:[%s352 + $0x30] sm:$0xff]
      %v380 = vld [vmem:[%s352 + $0x38] sm:$0xff]
      %v381 = vld [vmem:[%s352 + $0x40] sm:$0xff]
      %v382 = vld [vmem:[%s352 + $0x48] sm:$0xff]
      %v383 = vld [vmem:[%s352 + $0x50] sm:$0xff]
      %v384 = vld [vmem:[%s352 + $0x58] sm:$0xff]
      %v385 = vld [vmem:[%s352 + $0x60] sm:$0xff]
      %v386 = vld [vmem:[%s352 + $0x68] sm:$0xff]
      %v387 = vld [vmem:[%s352 + $0x70] sm:$0xff]
      %v388 = vld [vmem:[%s352 + $0x78] sm:$0xff]
      %v389 = vpack.c.bf16 %v374, %v373
      %v390 = vpack.c.bf16 %v376, %v375
      %v391 = vpack.c.bf16 %v378, %v377
      %v392 = vpack.c.bf16 %v380, %v379
      %v393 = vpack.c.bf16 %v382, %v381
      %v394 = vpack.c.bf16 %v384, %v383
      %v395 = vpack.c.bf16 %v386, %v385
      %v396 = vpack.c.bf16 %v388, %v387
      %v397 = vld [vmem:[%s2] sm:$0xff]
      %v398 = vld [vmem:[%s2 + $0x8] sm:$0xff]
      %v399 = vld [vmem:[%s3] sm:$0x3]
      %v401 = vlaneseq
      %v402 = vshrl.u32 %v401, 7
      %v403 = vsub.s32 0, %v402
      %v404 = vrot.slane %v399, %v403
      %v405 = vlaneseq
      %v406 = vshrl.u32 %v405, 7
      %v407 = vsub.s32 1, %v406
      %v408 = vrot.slane %v399, %v407
      %v413 = vunpack.c.l.b16 %v397
      %v414 = vunpack.c.h.b16 %v397
      %v415 = vunpack.c.l.b16 %v398
      %v416 = vunpack.c.h.b16 %v398
      %v417 = vpack.c.b16 %v415, %v413
      %v418 = vpack.c.b16 %v416, %v414
      %vm421 = vcmask 130048
      %v423 = vsel %vm421, %v389, 0
      %v426 = vsel %vm421, %v390, 0
      %v429 = vsel %vm421, %v391, 0
      %v432 = vsel %vm421, %v392, 0
      %v435 = vsel %vm421, %v393, 0
      %v438 = vsel %vm421, %v394, 0
      %v441 = vsel %vm421, %v395, 0
      %v444 = vsel %vm421, %v396, 0
      %446 = vmatprep.subr.bf16.mxu0 0
      %447 = vmatpush1.bf16.msra.mxu0 0
      %448 = vmatprep.subr.bf16.mxu0 0
      %449 = vmatpush1.bf16.msra.mxu0 0
      %450 = vmatprep.subr.bf16.mxu0 0
      %451 = vmatpush1.bf16.msra.mxu0 0
      %452 = vmatprep.subr.bf16.mxu0 0
      %453 = vmatpush1.bf16.msra.mxu0 0
      %454 = vmatprep.subr.bf16.mxu0 0
      %455 = vmatpush1.bf16.msra.mxu0 0
      %456 = vmatprep.subr.bf16.mxu0 0
      %457 = vmatpush1.bf16.msra.mxu0 0
      %458 = vmatprep.subr.bf16.mxu0 0
      %459 = vmatpush1.bf16.msra.mxu0 0
      %460 = vmatprep.subr.bf16.mxu0 %v418
      %461 = vmatpush1.bf16.msra.mxu0 %v417
      %462 = vmatprep.subr.bf16.mxu0 0
      %463 = vmatpush2.bf16.msra.mxu0 0
      %464 = vmatprep.subr.bf16.mxu0 0
      %465 = vmatpush2.bf16.msra.mxu0 0
      %466 = vmatprep.subr.bf16.mxu0 0
      %467 = vmatpush2.bf16.msra.mxu0 0
      %468 = vmatprep.subr.bf16.mxu0 0
      %469 = vmatpush2.bf16.msra.mxu0 0
      %470 = vmatprep.subr.bf16.mxu0 0
      %471 = vmatpush2.bf16.msra.mxu0 0
      %472 = vmatprep.subr.bf16.mxu0 0
      %473 = vmatpush2.bf16.msra.mxu0 0
      %474 = vmatprep.subr.bf16.mxu0 0
      %475 = vmatpush2.bf16.msra.mxu0 0
      %476 = vmatprep.subr.bf16.mxu0 0
      %477 = vmatpush2.bf16.msra.mxu0 0
      %478 = vmatprep.mubr.bf16.mxu0 0
      %479 = vmatmul.mubr.bf16.gmra.mxu0 %v423
      %v480 = vpop.f32.mrf.mxu0
      %v481 = vadd.f32 %v404, %v480
      %v482 = vpop.f32.mrf.mxu0
      %v483 = vadd.f32 %v408, %v482
      %v484 = vpop.f32.mrf.mxu0
      %v485 = vadd.f32 %v404, %v484
      %v486 = vpop.f32.mrf.mxu0
      %v487 = vadd.f32 %v408, %v486
      %488 = vmatprep.mubr.bf16.mxu0 0
      %489 = vmatmul.mubr.bf16.gmra.mxu0 %v426
      %v490 = vpop.f32.mrf.mxu0
      %v491 = vadd.f32 %v404, %v490
      %v492 = vpop.f32.mrf.mxu0
      %v493 = vadd.f32 %v408, %v492
      %v494 = vpop.f32.mrf.mxu0
      %v495 = vadd.f32 %v404, %v494
      %v496 = vpop.f32.mrf.mxu0
      %v497 = vadd.f32 %v408, %v496
      %498 = vmatprep.mubr.bf16.mxu0 0
      %499 = vmatmul.mubr.bf16.gmra.mxu0 %v429
      %v500 = vpop.f32.mrf.mxu0
      %v501 = vadd.f32 %v404, %v500
      %v502 = vpop.f32.mrf.mxu0
      %v503 = vadd.f32 %v408, %v502
      %v504 = vpop.f32.mrf.mxu0
      %v505 = vadd.f32 %v404, %v504
      %v506 = vpop.f32.mrf.mxu0
      %v507 = vadd.f32 %v408, %v506
      %508 = vmatprep.mubr.bf16.mxu0 0
      %509 = vmatmul.mubr.bf16.gmra.mxu0 %v432
      %v510 = vpop.f32.mrf.mxu0
      %v511 = vadd.f32 %v404, %v510
      %v512 = vpop.f32.mrf.mxu0
      %v513 = vadd.f32 %v408, %v512
      %v514 = vpop.f32.mrf.mxu0
      %v515 = vadd.f32 %v404, %v514
      %v516 = vpop.f32.mrf.mxu0
      %v517 = vadd.f32 %v408, %v516
      %518 = vmatprep.mubr.bf16.mxu0 0
      %519 = vmatmul.mubr.bf16.gmra.mxu0 %v435
      %v520 = vpop.f32.mrf.mxu0
      %v521 = vadd.f32 %v404, %v520
      %v522 = vpop.f32.mrf.mxu0
      %v523 = vadd.f32 %v408, %v522
      %v524 = vpop.f32.mrf.mxu0
      %v525 = vadd.f32 %v404, %v524
      %v526 = vpop.f32.mrf.mxu0
      %v527 = vadd.f32 %v408, %v526
      %528 = vmatprep.mubr.bf16.mxu0 0
      %529 = vmatmul.mubr.bf16.gmra.mxu0 %v438
      %v530 = vpop.f32.mrf.mxu0
      %v531 = vadd.f32 %v404, %v530
      %v532 = vpop.f32.mrf.mxu0
      %v533 = vadd.f32 %v408, %v532
      %v534 = vpop.f32.mrf.mxu0
      %v535 = vadd.f32 %v404, %v534
      %v536 = vpop.f32.mrf.mxu0
      %v537 = vadd.f32 %v408, %v536
      %538 = vmatprep.mubr.bf16.mxu0 0
      %539 = vmatmul.mubr.bf16.gmra.mxu0 %v441
      %v540 = vpop.f32.mrf.mxu0
      %v541 = vadd.f32 %v404, %v540
      %v542 = vpop.f32.mrf.mxu0
      %v543 = vadd.f32 %v408, %v542
      %v544 = vpop.f32.mrf.mxu0
      %v545 = vadd.f32 %v404, %v544
      %v546 = vpop.f32.mrf.mxu0
      %v547 = vadd.f32 %v408, %v546
      %548 = vmatprep.mubr.bf16.mxu0 0
      %549 = vmatmul.mubr.bf16.gmra.mxu0 %v444
      %v550 = vpop.f32.mrf.mxu0
      %v551 = vadd.f32 %v404, %v550
      %v552 = vpop.f32.mrf.mxu0
      %v553 = vadd.f32 %v408, %v552
      %v554 = vpop.f32.mrf.mxu0
      %v555 = vadd.f32 %v404, %v554
      %v556 = vpop.f32.mrf.mxu0
      %v557 = vadd.f32 %v408, %v556
      %558 = vdwg.mxu0
      %v559 = vmax.f32 %v481, 0.0
      %v560 = vmax.f32 %v483, 0.0
      %v561 = vmax.f32 %v485, 0.0
      %v562 = vmax.f32 %v487, 0.0
      %v563 = vmax.f32 %v491, 0.0
      %v564 = vmax.f32 %v493, 0.0
      %v565 = vmax.f32 %v495, 0.0
      %v566 = vmax.f32 %v497, 0.0
      %v567 = vmax.f32 %v501, 0.0
      %v568 = vmax.f32 %v503, 0.0
      %v569 = vmax.f32 %v505, 0.0
      %v570 = vmax.f32 %v507, 0.0
      %v571 = vmax.f32 %v511, 0.0
      %v572 = vmax.f32 %v513, 0.0
      %v573 = vmax.f32 %v515, 0.0
      %v574 = vmax.f32 %v517, 0.0
      %v575 = vmax.f32 %v521, 0.0
      %v576 = vmax.f32 %v523, 0.0
      %v577 = vmax.f32 %v525, 0.0
      %v578 = vmax.f32 %v527, 0.0
      %v579 = vmax.f32 %v531, 0.0
      %v580 = vmax.f32 %v533, 0.0
      %v581 = vmax.f32 %v535, 0.0
      %v582 = vmax.f32 %v537, 0.0
      %v583 = vmax.f32 %v541, 0.0
      %v584 = vmax.f32 %v543, 0.0
      %v585 = vmax.f32 %v545, 0.0
      %v586 = vmax.f32 %v547, 0.0
      %v587 = vmax.f32 %v551, 0.0
      %v588 = vmax.f32 %v553, 0.0
      %v589 = vmax.f32 %v555, 0.0
      %v590 = vmax.f32 %v557, 0.0
      %v591 = vpack.c.bf16 %v561, %v559
      %v592 = vpack.c.bf16 %v562, %v560
      %v593 = vpack.c.bf16 %v565, %v563
      %v594 = vpack.c.bf16 %v566, %v564
      %v595 = vpack.c.bf16 %v569, %v567
      %v596 = vpack.c.bf16 %v570, %v568
      %v597 = vpack.c.bf16 %v573, %v571
      %v598 = vpack.c.bf16 %v574, %v572
      %v599 = vpack.c.bf16 %v577, %v575
      %v600 = vpack.c.bf16 %v578, %v576
      %v601 = vpack.c.bf16 %v581, %v579
      %v602 = vpack.c.bf16 %v582, %v580
      %v603 = vpack.c.bf16 %v585, %v583
      %v604 = vpack.c.bf16 %v586, %v584
      %v605 = vpack.c.bf16 %v589, %v587
      %v606 = vpack.c.bf16 %v590, %v588
      %v607 = vld [vmem:[%s4] sm:$0xff]
      %v608 = vld [vmem:[%s4 + $0x8] sm:$0xff]
      %v609 = vld [vmem:[%s4 + $0x10] sm:$0xff]
      %v610 = vld [vmem:[%s4 + $0x18] sm:$0xff]
      %v611 = vld [vmem:[%s4 + $0x20] sm:$0xff]
      %v612 = vld [vmem:[%s4 + $0x28] sm:$0xff]
      %v613 = vld [vmem:[%s4 + $0x30] sm:$0xff]
      %v614 = vld [vmem:[%s4 + $0x38] sm:$0xff]
      %v615 = vld [vmem:[%s4 + $0x40] sm:$0xff]
      %v616 = vld [vmem:[%s4 + $0x48] sm:$0xff]
      %v617 = vld [vmem:[%s4 + $0x50] sm:$0xff]
      %v618 = vld [vmem:[%s4 + $0x58] sm:$0xff]
      %v619 = vld [vmem:[%s4 + $0x60] sm:$0xff]
      %v620 = vld [vmem:[%s4 + $0x68] sm:$0xff]
      %v621 = vld [vmem:[%s4 + $0x70] sm:$0xff]
      %v622 = vld [vmem:[%s4 + $0x78] sm:$0xff]
      %v623 = vld [vmem:[%s4 + $0x80] sm:$0xff]
      %v624 = vld [vmem:[%s4 + $0x88] sm:$0xff]
      %v625 = vld [vmem:[%s4 + $0x90] sm:$0xff]
      %v626 = vld [vmem:[%s4 + $0x98] sm:$0xff]
      %v627 = vld [vmem:[%s4 + $0xa0] sm:$0xff]
      %v628 = vld [vmem:[%s4 + $0xa8] sm:$0xff]
      %v629 = vld [vmem:[%s4 + $0xb0] sm:$0xff]
      %v630 = vld [vmem:[%s4 + $0xb8] sm:$0xff]
      %v631 = vld [vmem:[%s4 + $0xc0] sm:$0xff]
      %v632 = vld [vmem:[%s4 + $0xc8] sm:$0xff]
      %v633 = vld [vmem:[%s4 + $0xd0] sm:$0xff]
      %v634 = vld [vmem:[%s4 + $0xd8] sm:$0xff]
      %v635 = vld [vmem:[%s4 + $0xe0] sm:$0xff]
      %v636 = vld [vmem:[%s4 + $0xe8] sm:$0xff]
      %v637 = vld [vmem:[%s4 + $0xf0] sm:$0xff]
      %v638 = vld [vmem:[%s4 + $0xf8] sm:$0xff]
      %v639 = vld [vmem:[%s5] sm:$0x3]
      %v641 = vlaneseq
      %v642 = vshrl.u32 %v641, 7
      %v643 = vsub.s32 0, %v642
      %v644 = vrot.slane %v639, %v643
      %v645 = vlaneseq
      %v646 = vshrl.u32 %v645, 7
      %v647 = vsub.s32 1, %v646
      %v648 = vrot.slane %v639, %v647
      %v683 = vunpack.c.l.b16 %v607
      %v684 = vunpack.c.h.b16 %v607
      %v685 = vunpack.c.l.b16 %v608
      %v686 = vunpack.c.h.b16 %v608
      %v687 = vunpack.c.l.b16 %v609
      %v688 = vunpack.c.h.b16 %v609
      %v689 = vunpack.c.l.b16 %v610
      %v690 = vunpack.c.h.b16 %v610
      %v691 = vunpack.c.l.b16 %v611
      %v692 = vunpack.c.h.b16 %v611
      %v693 = vunpack.c.l.b16 %v612
      %v694 = vunpack.c.h.b16 %v612
      %v695 = vunpack.c.l.b16 %v613
      %v696 = vunpack.c.h.b16 %v613
      %v697 = vunpack.c.l.b16 %v614
      %v698 = vunpack.c.h.b16 %v614
      %v699 = vunpack.c.l.b16 %v615
      %v700 = vunpack.c.h.b16 %v615
      %v701 = vunpack.c.l.b16 %v616
      %v702 = vunpack.c.h.b16 %v616
      %v703 = vunpack.c.l.b16 %v617
      %v704 = vunpack.c.h.b16 %v617
      %v705 = vunpack.c.l.b16 %v618
      %v706 = vunpack.c.h.b16 %v618
      %v707 = vunpack.c.l.b16 %v619
      %v708 = vunpack.c.h.b16 %v619
      %v709 = vunpack.c.l.b16 %v620
      %v710 = vunpack.c.h.b16 %v620
      %v711 = vunpack.c.l.b16 %v621
      %v712 = vunpack.c.h.b16 %v621
      %v713 = vunpack.c.l.b16 %v622
      %v714 = vunpack.c.h.b16 %v622
      %v715 = vunpack.c.l.b16 %v623
      %v716 = vunpack.c.h.b16 %v623
      %v717 = vunpack.c.l.b16 %v624
      %v718 = vunpack.c.h.b16 %v624
      %v719 = vunpack.c.l.b16 %v625
      %v720 = vunpack.c.h.b16 %v625
      %v721 = vunpack.c.l.b16 %v626
      %v722 = vunpack.c.h.b16 %v626
      %v723 = vunpack.c.l.b16 %v627
      %v724 = vunpack.c.h.b16 %v627
      %v725 = vunpack.c.l.b16 %v628
      %v726 = vunpack.c.h.b16 %v628
      %v727 = vunpack.c.l.b16 %v629
      %v728 = vunpack.c.h.b16 %v629
      %v729 = vunpack.c.l.b16 %v630
      %v730 = vunpack.c.h.b16 %v630
      %v731 = vunpack.c.l.b16 %v631
      %v732 = vunpack.c.h.b16 %v631
      %v733 = vunpack.c.l.b16 %v632
      %v734 = vunpack.c.h.b16 %v632
      %v735 = vunpack.c.l.b16 %v633
      %v736 = vunpack.c.h.b16 %v633
      %v737 = vunpack.c.l.b16 %v634
      %v738 = vunpack.c.h.b16 %v634
      %v739 = vunpack.c.l.b16 %v635
      %v740 = vunpack.c.h.b16 %v635
      %v741 = vunpack.c.l.b16 %v636
      %v742 = vunpack.c.h.b16 %v636
      %v743 = vunpack.c.l.b16 %v637
      %v744 = vunpack.c.h.b16 %v637
      %v745 = vunpack.c.l.b16 %v638
      %v746 = vunpack.c.h.b16 %v638
      %v747 = vpack.c.b16 %v685, %v683
      %v748 = vpack.c.b16 %v686, %v684
      %v749 = vpack.c.b16 %v689, %v687
      %v750 = vpack.c.b16 %v690, %v688
      %v751 = vpack.c.b16 %v693, %v691
      %v752 = vpack.c.b16 %v694, %v692
      %v753 = vpack.c.b16 %v697, %v695
      %v754 = vpack.c.b16 %v698, %v696
      %v755 = vpack.c.b16 %v701, %v699
      %v756 = vpack.c.b16 %v702, %v700
      %v757 = vpack.c.b16 %v705, %v703
      %v758 = vpack.c.b16 %v706, %v704
      %v759 = vpack.c.b16 %v709, %v707
      %v760 = vpack.c.b16 %v710, %v708
      %v761 = vpack.c.b16 %v713, %v711
      %v762 = vpack.c.b16 %v714, %v712
      %v763 = vpack.c.b16 %v717, %v715
      %v764 = vpack.c.b16 %v718, %v716
      %v765 = vpack.c.b16 %v721, %v719
      %v766 = vpack.c.b16 %v722, %v720
      %v767 = vpack.c.b16 %v725, %v723
      %v768 = vpack.c.b16 %v726, %v724
      %v769 = vpack.c.b16 %v729, %v727
      %v770 = vpack.c.b16 %v730, %v728
      %v771 = vpack.c.b16 %v733, %v731
      %v772 = vpack.c.b16 %v734, %v732
      %v773 = vpack.c.b16 %v737, %v735
      %v774 = vpack.c.b16 %v738, %v736
      %v775 = vpack.c.b16 %v741, %v739
      %v776 = vpack.c.b16 %v742, %v740
      %v777 = vpack.c.b16 %v745, %v743
      %v778 = vpack.c.b16 %v746, %v744
      %811 = vmatprep.subr.bf16.mxu0 %v762
      %812 = vmatpush1.bf16.msra.mxu0 %v761
      %813 = vmatprep.subr.bf16.mxu0 %v760
      %814 = vmatpush1.bf16.msra.mxu0 %v759
      %815 = vmatprep.subr.bf16.mxu0 %v758
      %816 = vmatpush1.bf16.msra.mxu0 %v757
      %817 = vmatprep.subr.bf16.mxu0 %v756
      %818 = vmatpush1.bf16.msra.mxu0 %v755
      %819 = vmatprep.subr.bf16.mxu0 %v754
      %820 = vmatpush1.bf16.msra.mxu0 %v753
      %821 = vmatprep.subr.bf16.mxu0 %v752
      %822 = vmatpush1.bf16.msra.mxu0 %v751
      %823 = vmatprep.subr.bf16.mxu0 %v750
      %824 = vmatpush1.bf16.msra.mxu0 %v749
      %825 = vmatprep.subr.bf16.mxu0 %v748
      %826 = vmatpush1.bf16.msra.mxu0 %v747
      %827 = vmatprep.subr.bf16.mxu0 %v778
      %828 = vmatpush2.bf16.msra.mxu0 %v777
      %829 = vmatprep.subr.bf16.mxu0 %v776
      %830 = vmatpush2.bf16.msra.mxu0 %v775
      %831 = vmatprep.subr.bf16.mxu0 %v774
      %832 = vmatpush2.bf16.msra.mxu0 %v773
      %833 = vmatprep.subr.bf16.mxu0 %v772
      %834 = vmatpush2.bf16.msra.mxu0 %v771
      %835 = vmatprep.subr.bf16.mxu0 %v770
      %836 = vmatpush2.bf16.msra.mxu0 %v769
      %837 = vmatprep.subr.bf16.mxu0 %v768
      %838 = vmatpush2.bf16.msra.mxu0 %v767
      %839 = vmatprep.subr.bf16.mxu0 %v766
      %840 = vmatpush2.bf16.msra.mxu0 %v765
      %841 = vmatprep.subr.bf16.mxu0 %v764
      %842 = vmatpush2.bf16.msra.mxu0 %v763
      %843 = vmatprep.mubr.bf16.mxu0 %v592
      %844 = vmatmul.mubr.bf16.gmra.mxu0 %v591
      %v845 = vpop.f32.mrf.mxu0
      %v846 = vadd.f32 %v644, %v845
      %v847 = vpop.f32.mrf.mxu0
      %v848 = vadd.f32 %v648, %v847
      %v849 = vpop.f32.mrf.mxu0
      %v850 = vadd.f32 %v644, %v849
      %v851 = vpop.f32.mrf.mxu0
      %v852 = vadd.f32 %v648, %v851
      %853 = vmatprep.mubr.bf16.mxu0 %v594
      %854 = vmatmul.mubr.bf16.gmra.mxu0 %v593
      %v855 = vpop.f32.mrf.mxu0
      %v856 = vadd.f32 %v644, %v855
      %v857 = vpop.f32.mrf.mxu0
      %v858 = vadd.f32 %v648, %v857
      %v859 = vpop.f32.mrf.mxu0
      %v860 = vadd.f32 %v644, %v859
      %v861 = vpop.f32.mrf.mxu0
      %v862 = vadd.f32 %v648, %v861
      %863 = vmatprep.mubr.bf16.mxu0 %v596
      %864 = vmatmul.mubr.bf16.gmra.mxu0 %v595
      %v865 = vpop.f32.mrf.mxu0
      %v866 = vadd.f32 %v644, %v865
      %v867 = vpop.f32.mrf.mxu0
      %v868 = vadd.f32 %v648, %v867
      %v869 = vpop.f32.mrf.mxu0
      %v870 = vadd.f32 %v644, %v869
      %v871 = vpop.f32.mrf.mxu0
      %v872 = vadd.f32 %v648, %v871
      %873 = vmatprep.mubr.bf16.mxu0 %v598
      %874 = vmatmul.mubr.bf16.gmra.mxu0 %v597
      %v875 = vpop.f32.mrf.mxu0
      %v876 = vadd.f32 %v644, %v875
      %v877 = vpop.f32.mrf.mxu0
      %v878 = vadd.f32 %v648, %v877
      %v879 = vpop.f32.mrf.mxu0
      %v880 = vadd.f32 %v644, %v879
      %v881 = vpop.f32.mrf.mxu0
      %v882 = vadd.f32 %v648, %v881
      %883 = vmatprep.mubr.bf16.mxu0 %v600
      %884 = vmatmul.mubr.bf16.gmra.mxu0 %v599
      %v885 = vpop.f32.mrf.mxu0
      %v886 = vadd.f32 %v644, %v885
      %v887 = vpop.f32.mrf.mxu0
      %v888 = vadd.f32 %v648, %v887
      %v889 = vpop.f32.mrf.mxu0
      %v890 = vadd.f32 %v644, %v889
      %v891 = vpop.f32.mrf.mxu0
      %v892 = vadd.f32 %v648, %v891
      %893 = vmatprep.mubr.bf16.mxu0 %v602
      %894 = vmatmul.mubr.bf16.gmra.mxu0 %v601
      %v895 = vpop.f32.mrf.mxu0
      %v896 = vadd.f32 %v644, %v895
      %v897 = vpop.f32.mrf.mxu0
      %v898 = vadd.f32 %v648, %v897
      %v899 = vpop.f32.mrf.mxu0
      %v900 = vadd.f32 %v644, %v899
      %v901 = vpop.f32.mrf.mxu0
      %v902 = vadd.f32 %v648, %v901
      %903 = vmatprep.mubr.bf16.mxu0 %v604
      %904 = vmatmul.mubr.bf16.gmra.mxu0 %v603
      %v905 = vpop.f32.mrf.mxu0
      %v906 = vadd.f32 %v644, %v905
      %v907 = vpop.f32.mrf.mxu0
      %v908 = vadd.f32 %v648, %v907
      %v909 = vpop.f32.mrf.mxu0
      %v910 = vadd.f32 %v644, %v909
      %v911 = vpop.f32.mrf.mxu0
      %v912 = vadd.f32 %v648, %v911
      %913 = vmatprep.mubr.bf16.mxu0 %v606
      %914 = vmatmul.mubr.bf16.gmra.mxu0 %v605
      %v915 = vpop.f32.mrf.mxu0
      %v916 = vadd.f32 %v644, %v915
      %v917 = vpop.f32.mrf.mxu0
      %v918 = vadd.f32 %v648, %v917
      %v919 = vpop.f32.mrf.mxu0
      %v920 = vadd.f32 %v644, %v919
      %v921 = vpop.f32.mrf.mxu0
      %v922 = vadd.f32 %v648, %v921
      %923 = vdwg.mxu0
      %v924 = vmax.f32 %v846, 0.0
      %v925 = vmax.f32 %v848, 0.0
      %v926 = vmax.f32 %v850, 0.0
      %v927 = vmax.f32 %v852, 0.0
      %v928 = vmax.f32 %v856, 0.0
      %v929 = vmax.f32 %v858, 0.0
      %v930 = vmax.f32 %v860, 0.0
      %v931 = vmax.f32 %v862, 0.0
      %v932 = vmax.f32 %v866, 0.0
      %v933 = vmax.f32 %v868, 0.0
      %v934 = vmax.f32 %v870, 0.0
      %v935 = vmax.f32 %v872, 0.0
      %v936 = vmax.f32 %v876, 0.0
      %v937 = vmax.f32 %v878, 0.0
      %v938 = vmax.f32 %v880, 0.0
      %v939 = vmax.f32 %v882, 0.0
      %v940 = vmax.f32 %v886, 0.0
      %v941 = vmax.f32 %v888, 0.0
      %v942 = vmax.f32 %v890, 0.0
      %v943 = vmax.f32 %v892, 0.0
      %v944 = vmax.f32 %v896, 0.0
      %v945 = vmax.f32 %v898, 0.0
      %v946 = vmax.f32 %v900, 0.0
      %v947 = vmax.f32 %v902, 0.0
      %v948 = vmax.f32 %v906, 0.0
      %v949 = vmax.f32 %v908, 0.0
      %v950 = vmax.f32 %v910, 0.0
      %v951 = vmax.f32 %v912, 0.0
      %v952 = vmax.f32 %v916, 0.0
      %v953 = vmax.f32 %v918, 0.0
      %v954 = vmax.f32 %v920, 0.0
      %v955 = vmax.f32 %v922, 0.0
      %v956 = vpack.c.bf16 %v926, %v924
      %v957 = vpack.c.bf16 %v927, %v925
      %v958 = vpack.c.bf16 %v930, %v928
      %v959 = vpack.c.bf16 %v931, %v929
      %v960 = vpack.c.bf16 %v934, %v932
      %v961 = vpack.c.bf16 %v935, %v933
      %v962 = vpack.c.bf16 %v938, %v936
      %v963 = vpack.c.bf16 %v939, %v937
      %v964 = vpack.c.bf16 %v942, %v940
      %v965 = vpack.c.bf16 %v943, %v941
      %v966 = vpack.c.bf16 %v946, %v944
      %v967 = vpack.c.bf16 %v947, %v945
      %v968 = vpack.c.bf16 %v950, %v948
      %v969 = vpack.c.bf16 %v951, %v949
      %v970 = vpack.c.bf16 %v954, %v952
      %v971 = vpack.c.bf16 %v955, %v953
      %v972 = vld [vmem:[%s6] sm:$0xf]
      %v973 = vld [vmem:[%s6 + $0x4] sm:$0xf]
      %v974 = vld [vmem:[%s6 + $0x8] sm:$0xf]
      %v975 = vld [vmem:[%s6 + $0xc] sm:$0xf]
      %v976 = vld [vmem:[%s6 + $0x10] sm:$0xf]
      %v977 = vld [vmem:[%s6 + $0x14] sm:$0xf]
      %v978 = vld [vmem:[%s6 + $0x18] sm:$0xf]
      %v979 = vld [vmem:[%s6 + $0x1c] sm:$0xf]
      %v980 = vld [vmem:[%s6 + $0x20] sm:$0xf]
      %v981 = vld [vmem:[%s6 + $0x24] sm:$0xf]
      %v982 = vld [vmem:[%s6 + $0x28] sm:$0xf]
      %v983 = vld [vmem:[%s6 + $0x2c] sm:$0xf]
      %v984 = vld [vmem:[%s6 + $0x30] sm:$0xf]
      %v985 = vld [vmem:[%s6 + $0x34] sm:$0xf]
      %v986 = vld [vmem:[%s6 + $0x38] sm:$0xf]
      %v987 = vld [vmem:[%s6 + $0x3c] sm:$0xf]
      %v988 = vld [vmem:[%s6 + $0x40] sm:$0xf]
      %v989 = vld [vmem:[%s6 + $0x44] sm:$0xf]
      %v990 = vld [vmem:[%s6 + $0x48] sm:$0xf]
      %v991 = vld [vmem:[%s6 + $0x4c] sm:$0xf]
      %v992 = vld [vmem:[%s6 + $0x50] sm:$0xf]
      %v993 = vld [vmem:[%s6 + $0x54] sm:$0xf]
      %v994 = vld [vmem:[%s6 + $0x58] sm:$0xf]
      %v995 = vld [vmem:[%s6 + $0x5c] sm:$0xf]
      %v996 = vld [vmem:[%s6 + $0x60] sm:$0xf]
      %v997 = vld [vmem:[%s6 + $0x64] sm:$0xf]
      %v998 = vld [vmem:[%s6 + $0x68] sm:$0xf]
      %v999 = vld [vmem:[%s6 + $0x6c] sm:$0xf]
      %v1000 = vld [vmem:[%s6 + $0x70] sm:$0xf]
      %v1001 = vld [vmem:[%s6 + $0x74] sm:$0xf]
      %v1002 = vld [vmem:[%s6 + $0x78] sm:$0xf]
      %v1003 = vld [vmem:[%s6 + $0x7c] sm:$0xf]
      %v1004 = vld [vmem:[%s7] sm:$0x1]
      %v1006 = vlaneseq
      %v1007 = vshrl.u32 %v1006, 7
      %v1008 = vsub.s32 0, %v1007
      %v1009 = vrot.slane %v1004, %v1008
      %v1043 = vunpack.c.l.b16 %v972
      %v1044 = vunpack.c.l.b16 %v973
      %v1045 = vunpack.c.l.b16 %v974
      %v1046 = vunpack.c.l.b16 %v975
      %v1047 = vunpack.c.l.b16 %v976
      %v1048 = vunpack.c.l.b16 %v977
      %v1049 = vunpack.c.l.b16 %v978
      %v1050 = vunpack.c.l.b16 %v979
      %v1051 = vunpack.c.l.b16 %v980
      %v1052 = vunpack.c.l.b16 %v981
      %v1053 = vunpack.c.l.b16 %v982
      %v1054 = vunpack.c.l.b16 %v983
      %v1055 = vunpack.c.l.b16 %v984
      %v1056 = vunpack.c.l.b16 %v985
      %v1057 = vunpack.c.l.b16 %v986
      %v1058 = vunpack.c.l.b16 %v987
      %v1059 = vunpack.c.l.b16 %v988
      %v1060 = vunpack.c.l.b16 %v989
      %v1061 = vunpack.c.l.b16 %v990
      %v1062 = vunpack.c.l.b16 %v991
      %v1063 = vunpack.c.l.b16 %v992
      %v1064 = vunpack.c.l.b16 %v993
      %v1065 = vunpack.c.l.b16 %v994
      %v1066 = vunpack.c.l.b16 %v995
      %v1067 = vunpack.c.l.b16 %v996
      %v1068 = vunpack.c.l.b16 %v997
      %v1069 = vunpack.c.l.b16 %v998
      %v1070 = vunpack.c.l.b16 %v999
      %v1071 = vunpack.c.l.b16 %v1000
      %v1072 = vunpack.c.l.b16 %v1001
      %v1073 = vunpack.c.l.b16 %v1002
      %v1074 = vunpack.c.l.b16 %v1003
      %v1075 = vpack.c.b16 %v1044, %v1043
      %v1076 = vpack.c.b16 %v1046, %v1045
      %v1077 = vpack.c.b16 %v1048, %v1047
      %v1078 = vpack.c.b16 %v1050, %v1049
      %v1079 = vpack.c.b16 %v1052, %v1051
      %v1080 = vpack.c.b16 %v1054, %v1053
      %v1081 = vpack.c.b16 %v1056, %v1055
      %v1082 = vpack.c.b16 %v1058, %v1057
      %v1083 = vpack.c.b16 %v1060, %v1059
      %v1084 = vpack.c.b16 %v1062, %v1061
      %v1085 = vpack.c.b16 %v1064, %v1063
      %v1086 = vpack.c.b16 %v1066, %v1065
      %v1087 = vpack.c.b16 %v1068, %v1067
      %v1088 = vpack.c.b16 %v1070, %v1069
      %v1089 = vpack.c.b16 %v1072, %v1071
      %v1090 = vpack.c.b16 %v1074, %v1073
      %1107 = vmatprep.subr.bf16.mxu0 0
      %1108 = vmatpush1.bf16.msra.mxu0 %v1082
      %1109 = vmatprep.subr.bf16.mxu0 0
      %1110 = vmatpush1.bf16.msra.mxu0 %v1081
      %1111 = vmatprep.subr.bf16.mxu0 0
      %1112 = vmatpush1.bf16.msra.mxu0 %v1080
      %1113 = vmatprep.subr.bf16.mxu0 0
      %1114 = vmatpush1.bf16.msra.mxu0 %v1079
      %1115 = vmatprep.subr.bf16.mxu0 0
      %1116 = vmatpush1.bf16.msra.mxu0 %v1078
      %1117 = vmatprep.subr.bf16.mxu0 0
      %1118 = vmatpush1.bf16.msra.mxu0 %v1077
      %1119 = vmatprep.subr.bf16.mxu0 0
      %1120 = vmatpush1.bf16.msra.mxu0 %v1076
      %1121 = vmatprep.subr.bf16.mxu0 0
      %1122 = vmatpush1.bf16.msra.mxu0 %v1075
      %1123 = vmatprep.subr.bf16.mxu0 0
      %1124 = vmatpush2.bf16.msra.mxu0 %v1090
      %1125 = vmatprep.subr.bf16.mxu0 0
      %1126 = vmatpush2.bf16.msra.mxu0 %v1089
      %1127 = vmatprep.subr.bf16.mxu0 0
      %1128 = vmatpush2.bf16.msra.mxu0 %v1088
      %1129 = vmatprep.subr.bf16.mxu0 0
      %1130 = vmatpush2.bf16.msra.mxu0 %v1087
      %1131 = vmatprep.subr.bf16.mxu0 0
      %1132 = vmatpush2.bf16.msra.mxu0 %v1086
      %1133 = vmatprep.subr.bf16.mxu0 0
      %1134 = vmatpush2.bf16.msra.mxu0 %v1085
      %1135 = vmatprep.subr.bf16.mxu0 0
      %1136 = vmatpush2.bf16.msra.mxu0 %v1084
      %1137 = vmatprep.subr.bf16.mxu0 0
      %1138 = vmatpush2.bf16.msra.mxu0 %v1083
      %1139 = vmatprep.mubr.bf16.mxu0 %v957
      %1140 = vmatmul.mubr.bf16.gmra.mxu0 %v956
      %v1141 = vpop.f32.mrf.mxu0
      %v1142 = vadd.f32 %v1009, %v1141
      %v1143 = vpop.f32.mrf.mxu0
      %v1144 = vpop.f32.mrf.mxu0
      %v1145 = vadd.f32 %v1009, %v1144
      %v1146 = vpop.f32.mrf.mxu0
      %1147 = vmatprep.mubr.bf16.mxu0 %v959
      %1148 = vmatmul.mubr.bf16.gmra.mxu0 %v958
      %v1149 = vpop.f32.mrf.mxu0
      %v1150 = vadd.f32 %v1009, %v1149
      %v1151 = vpop.f32.mrf.mxu0
      %v1152 = vpop.f32.mrf.mxu0
      %v1153 = vadd.f32 %v1009, %v1152
      %v1154 = vpop.f32.mrf.mxu0
      %1155 = vmatprep.mubr.bf16.mxu0 %v961
      %1156 = vmatmul.mubr.bf16.gmra.mxu0 %v960
      %v1157 = vpop.f32.mrf.mxu0
      %v1158 = vadd.f32 %v1009, %v1157
      %v1159 = vpop.f32.mrf.mxu0
      %v1160 = vpop.f32.mrf.mxu0
      %v1161 = vadd.f32 %v1009, %v1160
      %v1162 = vpop.f32.mrf.mxu0
      %1163 = vmatprep.mubr.bf16.mxu0 %v963
      %1164 = vmatmul.mubr.bf16.gmra.mxu0 %v962
      %v1165 = vpop.f32.mrf.mxu0
      %v1166 = vadd.f32 %v1009, %v1165
      %v1167 = vpop.f32.mrf.mxu0
      %v1168 = vpop.f32.mrf.mxu0
      %v1169 = vadd.f32 %v1009, %v1168
      %v1170 = vpop.f32.mrf.mxu0
      %1171 = vmatprep.mubr.bf16.mxu0 %v965
      %1172 = vmatmul.mubr.bf16.gmra.mxu0 %v964
      %v1173 = vpop.f32.mrf.mxu0
      %v1174 = vadd.f32 %v1009, %v1173
      %v1175 = vpop.f32.mrf.mxu0
      %v1176 = vpop.f32.mrf.mxu0
      %v1177 = vadd.f32 %v1009, %v1176
      %v1178 = vpop.f32.mrf.mxu0
      %1179 = vmatprep.mubr.bf16.mxu0 %v967
      %1180 = vmatmul.mubr.bf16.gmra.mxu0 %v966
      %v1181 = vpop.f32.mrf.mxu0
      %v1182 = vadd.f32 %v1009, %v1181
      %v1183 = vpop.f32.mrf.mxu0
      %v1184 = vpop.f32.mrf.mxu0
      %v1185 = vadd.f32 %v1009, %v1184
      %v1186 = vpop.f32.mrf.mxu0
      %1187 = vmatprep.mubr.bf16.mxu0 %v969
      %1188 = vmatmul.mubr.bf16.gmra.mxu0 %v968
      %v1189 = vpop.f32.mrf.mxu0
      %v1190 = vadd.f32 %v1009, %v1189
      %v1191 = vpop.f32.mrf.mxu0
      %v1192 = vpop.f32.mrf.mxu0
      %v1193 = vadd.f32 %v1009, %v1192
      %v1194 = vpop.f32.mrf.mxu0
      %1195 = vmatprep.mubr.bf16.mxu0 %v971
      %1196 = vmatmul.mubr.bf16.gmra.mxu0 %v970
      %v1197 = vpop.f32.mrf.mxu0
      %v1198 = vadd.f32 %v1009, %v1197
      %v1199 = vpop.f32.mrf.mxu0
      %v1200 = vpop.f32.mrf.mxu0
      %v1201 = vadd.f32 %v1009, %v1200
      %v1202 = vpop.f32.mrf.mxu0
      %1203 = vdwg.mxu0
      %v1204 = vmax.f32 %v1142, -20.0
      %v1205 = vmax.f32 %v1145, -20.0
      %v1206 = vmax.f32 %v1150, -20.0
      %v1207 = vmax.f32 %v1153, -20.0
      %v1208 = vmax.f32 %v1158, -20.0
      %v1209 = vmax.f32 %v1161, -20.0
      %v1210 = vmax.f32 %v1166, -20.0
      %v1211 = vmax.f32 %v1169, -20.0
      %v1212 = vmax.f32 %v1174, -20.0
      %v1213 = vmax.f32 %v1177, -20.0
      %v1214 = vmax.f32 %v1182, -20.0
      %v1215 = vmax.f32 %v1185, -20.0
      %v1216 = vmax.f32 %v1190, -20.0
      %v1217 = vmax.f32 %v1193, -20.0
      %v1218 = vmax.f32 %v1198, -20.0
      %v1219 = vmax.f32 %v1201, -20.0
      %v1220 = vmin.f32 %v1204, 2.0
      %v1221 = vmin.f32 %v1205, 2.0
      %v1222 = vmin.f32 %v1206, 2.0
      %v1223 = vmin.f32 %v1207, 2.0
      %v1224 = vmin.f32 %v1208, 2.0
      %v1225 = vmin.f32 %v1209, 2.0
      %v1226 = vmin.f32 %v1210, 2.0
      %v1227 = vmin.f32 %v1211, 2.0
      %v1228 = vmin.f32 %v1212, 2.0
      %v1229 = vmin.f32 %v1213, 2.0
      %v1230 = vmin.f32 %v1214, 2.0
      %v1231 = vmin.f32 %v1215, 2.0
      %v1232 = vmin.f32 %v1216, 2.0
      %v1233 = vmin.f32 %v1217, 2.0
      %v1234 = vmin.f32 %v1218, 2.0
      %v1235 = vmin.f32 %v1219, 2.0
      %v1236 = vmul.f32 %v1220, 1.442695
      %v1237 = vpow.pop %v1236
      %v1238 = vmul.f32 %v1221, 1.442695
      %v1239 = vpow.pop %v1238
      %v1240 = vmul.f32 %v1222, 1.442695
      %v1241 = vpow.pop %v1240
      %v1242 = vmul.f32 %v1223, 1.442695
      %v1243 = vpow.pop %v1242
      %v1244 = vmul.f32 %v1224, 1.442695
      %v1245 = vpow.pop %v1244
      %v1246 = vmul.f32 %v1225, 1.442695
      %v1247 = vpow.pop %v1246
      %v1248 = vmul.f32 %v1226, 1.442695
      %v1249 = vpow.pop %v1248
      %v1250 = vmul.f32 %v1227, 1.442695
      %v1251 = vpow.pop %v1250
      %v1252 = vmul.f32 %v1228, 1.442695
      %v1253 = vpow.pop %v1252
      %v1254 = vmul.f32 %v1229, 1.442695
      %v1255 = vpow.pop %v1254
      %v1256 = vmul.f32 %v1230, 1.442695
      %v1257 = vpow.pop %v1256
      %v1258 = vmul.f32 %v1231, 1.442695
      %v1259 = vpow.pop %v1258
      %v1260 = vmul.f32 %v1232, 1.442695
      %v1261 = vpow.pop %v1260
      %v1262 = vmul.f32 %v1233, 1.442695
      %v1263 = vpow.pop %v1262
      %v1264 = vmul.f32 %v1234, 1.442695
      %v1265 = vpow.pop %v1264
      %v1266 = vmul.f32 %v1235, 1.442695
      %v1267 = vpow.pop %v1266
      %v1268 = vld [vmem:[%s358] sm:$0xff]
      %v1269 = vld [vmem:[%s358 + $0x8] sm:$0xff]
      %v1270 = vld [vmem:[%s358 + $0x10] sm:$0xff]
      %v1271 = vld [vmem:[%s358 + $0x18] sm:$0xff]
      %v1272 = vld [vmem:[%s358 + $0x20] sm:$0xff]
      %v1273 = vld [vmem:[%s358 + $0x28] sm:$0xff]
      %v1274 = vld [vmem:[%s358 + $0x30] sm:$0xff]
      %v1275 = vld [vmem:[%s358 + $0x38] sm:$0xff]
      %v1276 = vld [vmem:[%s358 + $0x40] sm:$0xff]
      %v1277 = vld [vmem:[%s358 + $0x48] sm:$0xff]
      %v1278 = vld [vmem:[%s358 + $0x50] sm:$0xff]
      %v1279 = vld [vmem:[%s358 + $0x58] sm:$0xff]
      %v1280 = vld [vmem:[%s358 + $0x60] sm:$0xff]
      %v1281 = vld [vmem:[%s358 + $0x68] sm:$0xff]
      %v1282 = vld [vmem:[%s358 + $0x70] sm:$0xff]
      %v1283 = vld [vmem:[%s358 + $0x78] sm:$0xff]
      %1300 = vrot.lane.b32.xlu0 %v1268, 8
      %v1301 = vpop.permute.xlu0 %1300
      %1302 = vrot.lane.b32.xlu0 %v1269, 8
      %v1303 = vpop.permute.xlu0 %1302
      %1304 = vrot.lane.b32.xlu0 %v1270, 8
      %v1305 = vpop.permute.xlu0 %1304
      %1306 = vrot.lane.b32.xlu0 %v1271, 8
      %v1307 = vpop.permute.xlu0 %1306
      %1308 = vrot.lane.b32.xlu0 %v1272, 8
      %v1309 = vpop.permute.xlu0 %1308
      %1310 = vrot.lane.b32.xlu0 %v1273, 8
      %v1311 = vpop.permute.xlu0 %1310
      %1312 = vrot.lane.b32.xlu0 %v1274, 8
      %v1313 = vpop.permute.xlu0 %1312
      %1314 = vrot.lane.b32.xlu0 %v1275, 8
      %v1315 = vpop.permute.xlu0 %1314
      %1316 = vrot.lane.b32.xlu0 %v1276, 8
      %v1317 = vpop.permute.xlu0 %1316
      %1318 = vrot.lane.b32.xlu0 %v1277, 8
      %v1319 = vpop.permute.xlu0 %1318
      %1320 = vrot.lane.b32.xlu0 %v1278, 8
      %v1321 = vpop.permute.xlu0 %1320
      %1322 = vrot.lane.b32.xlu0 %v1279, 8
      %v1323 = vpop.permute.xlu0 %1322
      %1324 = vrot.lane.b32.xlu0 %v1280, 8
      %v1325 = vpop.permute.xlu0 %1324
      %1326 = vrot.lane.b32.xlu0 %v1281, 8
      %v1327 = vpop.permute.xlu0 %1326
      %1328 = vrot.lane.b32.xlu0 %v1282, 8
      %v1329 = vpop.permute.xlu0 %1328
      %1330 = vrot.lane.b32.xlu0 %v1283, 8
      %v1331 = vpop.permute.xlu0 %1330
      %v1348 = vmul.f32 %v1237, %v1301
      %v1349 = vmul.f32 %v1239, %v1303
      %v1350 = vmul.f32 %v1241, %v1305
      %v1351 = vmul.f32 %v1243, %v1307
      %v1352 = vmul.f32 %v1245, %v1309
      %v1353 = vmul.f32 %v1247, %v1311
      %v1354 = vmul.f32 %v1249, %v1313
      %v1355 = vmul.f32 %v1251, %v1315
      %v1356 = vmul.f32 %v1253, %v1317
      %v1357 = vmul.f32 %v1255, %v1319
      %v1358 = vmul.f32 %v1257, %v1321
      %v1359 = vmul.f32 %v1259, %v1323
      %v1360 = vmul.f32 %v1261, %v1325
      %v1361 = vmul.f32 %v1263, %v1327
      %v1362 = vmul.f32 %v1265, %v1329
      %v1363 = vmul.f32 %v1267, %v1331
      %1380 = vrot.lane.b32.xlu0 %v1348, 120
      %v1381 = vpop.permute.xlu0 %1380
      %1382 = vrot.lane.b32.xlu0 %v1349, 120
      %v1383 = vpop.permute.xlu0 %1382
      %1384 = vrot.lane.b32.xlu0 %v1350, 120
      %v1385 = vpop.permute.xlu0 %1384
      %1386 = vrot.lane.b32.xlu0 %v1351, 120
      %v1387 = vpop.permute.xlu0 %1386
      %1388 = vrot.lane.b32.xlu0 %v1352, 120
      %v1389 = vpop.permute.xlu0 %1388
      %1390 = vrot.lane.b32.xlu0 %v1353, 120
      %v1391 = vpop.permute.xlu0 %1390
      %1392 = vrot.lane.b32.xlu0 %v1354, 120
      %v1393 = vpop.permute.xlu0 %1392
      %1394 = vrot.lane.b32.xlu0 %v1355, 120
      %v1395 = vpop.permute.xlu0 %1394
      %1396 = vrot.lane.b32.xlu0 %v1356, 120
      %v1397 = vpop.permute.xlu0 %1396
      %1398 = vrot.lane.b32.xlu0 %v1357, 120
      %v1399 = vpop.permute.xlu0 %1398
      %1400 = vrot.lane.b32.xlu0 %v1358, 120
      %v1401 = vpop.permute.xlu0 %1400
      %1402 = vrot.lane.b32.xlu0 %v1359, 120
      %v1403 = vpop.permute.xlu0 %1402
      %1404 = vrot.lane.b32.xlu0 %v1360, 120
      %v1405 = vpop.permute.xlu0 %1404
      %1406 = vrot.lane.b32.xlu0 %v1361, 120
      %v1407 = vpop.permute.xlu0 %1406
      %1408 = vrot.lane.b32.xlu0 %v1362, 120
      %v1409 = vpop.permute.xlu0 %1408
      %1410 = vrot.lane.b32.xlu0 %v1363, 120
      %v1411 = vpop.permute.xlu0 %1410
      %v1428 = vadd.f32 %v1142, %v1381
      %v1429 = vadd.f32 %v1145, %v1383
      %v1430 = vadd.f32 %v1150, %v1385
      %v1431 = vadd.f32 %v1153, %v1387
      %v1432 = vadd.f32 %v1158, %v1389
      %v1433 = vadd.f32 %v1161, %v1391
      %v1434 = vadd.f32 %v1166, %v1393
      %v1435 = vadd.f32 %v1169, %v1395
      %v1436 = vadd.f32 %v1174, %v1397
      %v1437 = vadd.f32 %v1177, %v1399
      %v1438 = vadd.f32 %v1182, %v1401
      %v1439 = vadd.f32 %v1185, %v1403
      %v1440 = vadd.f32 %v1190, %v1405
      %v1441 = vadd.f32 %v1193, %v1407
      %v1442 = vadd.f32 %v1198, %v1409
      %v1443 = vadd.f32 %v1201, %v1411
      %v1444 = vtanh.pop %v1428
      %v1445 = vtanh.pop %v1429
      %v1446 = vtanh.pop %v1430
      %v1447 = vtanh.pop %v1431
      %v1448 = vtanh.pop %v1432
      %v1449 = vtanh.pop %v1433
      %v1450 = vtanh.pop %v1434
      %v1451 = vtanh.pop %v1435
      %v1452 = vtanh.pop %v1436
      %v1453 = vtanh.pop %v1437
      %v1454 = vtanh.pop %v1438
      %v1455 = vtanh.pop %v1439
      %v1456 = vtanh.pop %v1440
      %v1457 = vtanh.pop %v1441
      %v1458 = vtanh.pop %v1442
      %v1459 = vtanh.pop %v1443
      %v1460 = vsub.f32 0.6931472, %v1428
      %v1461 = vsub.f32 0.6931472, %v1429
      %v1462 = vsub.f32 0.6931472, %v1430
      %v1463 = vsub.f32 0.6931472, %v1431
      %v1464 = vsub.f32 0.6931472, %v1432
      %v1465 = vsub.f32 0.6931472, %v1433
      %v1466 = vsub.f32 0.6931472, %v1434
      %v1467 = vsub.f32 0.6931472, %v1435
      %v1468 = vsub.f32 0.6931472, %v1436
      %v1469 = vsub.f32 0.6931472, %v1437
      %v1470 = vsub.f32 0.6931472, %v1438
      %v1471 = vsub.f32 0.6931472, %v1439
      %v1472 = vsub.f32 0.6931472, %v1440
      %v1473 = vsub.f32 0.6931472, %v1441
      %v1474 = vsub.f32 0.6931472, %v1442
      %v1475 = vsub.f32 0.6931472, %v1443
      %v1476 = vmul.f32 %v1428, -2.0
      %v1477 = vmul.f32 %v1429, -2.0
      %v1478 = vmul.f32 %v1430, -2.0
      %v1479 = vmul.f32 %v1431, -2.0
      %v1480 = vmul.f32 %v1432, -2.0
      %v1481 = vmul.f32 %v1433, -2.0
      %v1482 = vmul.f32 %v1434, -2.0
      %v1483 = vmul.f32 %v1435, -2.0
      %v1484 = vmul.f32 %v1436, -2.0
      %v1485 = vmul.f32 %v1437, -2.0
      %v1486 = vmul.f32 %v1438, -2.0
      %v1487 = vmul.f32 %v1439, -2.0
      %v1488 = vmul.f32 %v1440, -2.0
      %v1489 = vmul.f32 %v1441, -2.0
      %v1490 = vmul.f32 %v1442, -2.0
      %v1491 = vmul.f32 %v1443, -2.0
      %v1492 = vmax.f32 %v1476, 0.0
      %v1493 = vmax.f32 %v1477, 0.0
      %v1494 = vmax.f32 %v1478, 0.0
      %v1495 = vmax.f32 %v1479, 0.0
      %v1496 = vmax.f32 %v1480, 0.0
      %v1497 = vmax.f32 %v1481, 0.0
      %v1498 = vmax.f32 %v1482, 0.0
      %v1499 = vmax.f32 %v1483, 0.0
      %v1500 = vmax.f32 %v1484, 0.0
      %v1501 = vmax.f32 %v1485, 0.0
      %v1502 = vmax.f32 %v1486, 0.0
      %v1503 = vmax.f32 %v1487, 0.0
      %v1504 = vmax.f32 %v1488, 0.0
      %v1505 = vmax.f32 %v1489, 0.0
      %v1506 = vmax.f32 %v1490, 0.0
      %v1507 = vmax.f32 %v1491, 0.0
      %vm1508 = vcmp.ne.f32.partialorder %v1476, %v1476
      %vm1509 = vcmp.ne.f32.partialorder %v1477, %v1477
      %vm1510 = vcmp.ne.f32.partialorder %v1478, %v1478
      %vm1511 = vcmp.ne.f32.partialorder %v1479, %v1479
      %vm1512 = vcmp.ne.f32.partialorder %v1480, %v1480
      %vm1513 = vcmp.ne.f32.partialorder %v1481, %v1481
      %vm1514 = vcmp.ne.f32.partialorder %v1482, %v1482
      %vm1515 = vcmp.ne.f32.partialorder %v1483, %v1483
      %vm1516 = vcmp.ne.f32.partialorder %v1484, %v1484
      %vm1517 = vcmp.ne.f32.partialorder %v1485, %v1485
      %vm1518 = vcmp.ne.f32.partialorder %v1486, %v1486
      %vm1519 = vcmp.ne.f32.partialorder %v1487, %v1487
      %vm1520 = vcmp.ne.f32.partialorder %v1488, %v1488
      %vm1521 = vcmp.ne.f32.partialorder %v1489, %v1489
      %vm1522 = vcmp.ne.f32.partialorder %v1490, %v1490
      %vm1523 = vcmp.ne.f32.partialorder %v1491, %v1491
      %v1524 = vadd.f32 %v1476, 0.0
      %v1525 = vadd.f32 %v1477, 0.0
      %v1526 = vadd.f32 %v1478, 0.0
      %v1527 = vadd.f32 %v1479, 0.0
      %v1528 = vadd.f32 %v1480, 0.0
      %v1529 = vadd.f32 %v1481, 0.0
      %v1530 = vadd.f32 %v1482, 0.0
      %v1531 = vadd.f32 %v1483, 0.0
      %v1532 = vadd.f32 %v1484, 0.0
      %v1533 = vadd.f32 %v1485, 0.0
      %v1534 = vadd.f32 %v1486, 0.0
      %v1535 = vadd.f32 %v1487, 0.0
      %v1536 = vadd.f32 %v1488, 0.0
      %v1537 = vadd.f32 %v1489, 0.0
      %v1538 = vadd.f32 %v1490, 0.0
      %v1539 = vadd.f32 %v1491, 0.0
      %v1540 = vand.u32 2147483647, %v1476
      %v1541 = vand.u32 2147483647, %v1477
      %v1542 = vand.u32 2147483647, %v1478
      %v1543 = vand.u32 2147483647, %v1479
      %v1544 = vand.u32 2147483647, %v1480
      %v1545 = vand.u32 2147483647, %v1481
      %v1546 = vand.u32 2147483647, %v1482
      %v1547 = vand.u32 2147483647, %v1483
      %v1548 = vand.u32 2147483647, %v1484
      %v1549 = vand.u32 2147483647, %v1485
      %v1550 = vand.u32 2147483647, %v1486
      %v1551 = vand.u32 2147483647, %v1487
      %v1552 = vand.u32 2147483647, %v1488
      %v1553 = vand.u32 2147483647, %v1489
      %v1554 = vand.u32 2147483647, %v1490
      %v1555 = vand.u32 2147483647, %v1491
      %v1556 = vsub.f32 0.0, %v1540
      %v1557 = vsub.f32 0.0, %v1541
      %v1558 = vsub.f32 0.0, %v1542
      %v1559 = vsub.f32 0.0, %v1543
      %v1560 = vsub.f32 0.0, %v1544
      %v1561 = vsub.f32 0.0, %v1545
      %v1562 = vsub.f32 0.0, %v1546
      %v1563 = vsub.f32 0.0, %v1547
      %v1564 = vsub.f32 0.0, %v1548
      %v1565 = vsub.f32 0.0, %v1549
      %v1566 = vsub.f32 0.0, %v1550
      %v1567 = vsub.f32 0.0, %v1551
      %v1568 = vsub.f32 0.0, %v1552
      %v1569 = vsub.f32 0.0, %v1553
      %v1570 = vsub.f32 0.0, %v1554
      %v1571 = vsub.f32 0.0, %v1555
      %v1572 = vmul.f32 %v1556, 1.442695
      %v1573 = vpow.pop %v1572
      %v1574 = vmul.f32 %v1557, 1.442695
      %v1575 = vpow.pop %v1574
      %v1576 = vmul.f32 %v1558, 1.442695
      %v1577 = vpow.pop %v1576
      %v1578 = vmul.f32 %v1559, 1.442695
      %v1579 = vpow.pop %v1578
      %v1580 = vmul.f32 %v1560, 1.442695
      %v1581 = vpow.pop %v1580
      %v1582 = vmul.f32 %v1561, 1.442695
      %v1583 = vpow.pop %v1582
      %v1584 = vmul.f32 %v1562, 1.442695
      %v1585 = vpow.pop %v1584
      %v1586 = vmul.f32 %v1563, 1.442695
      %v1587 = vpow.pop %v1586
      %v1588 = vmul.f32 %v1564, 1.442695
      %v1589 = vpow.pop %v1588
      %v1590 = vmul.f32 %v1565, 1.442695
      %v1591 = vpow.pop %v1590
      %v1592 = vmul.f32 %v1566, 1.442695
      %v1593 = vpow.pop %v1592
      %v1594 = vmul.f32 %v1567, 1.442695
      %v1595 = vpow.pop %v1594
      %v1596 = vmul.f32 %v1568, 1.442695
      %v1597 = vpow.pop %v1596
      %v1598 = vmul.f32 %v1569, 1.442695
      %v1599 = vpow.pop %v1598
      %v1600 = vmul.f32 %v1570, 1.442695
      %v1601 = vpow.pop %v1600
      %v1602 = vmul.f32 %v1571, 1.442695
      %v1603 = vpow.pop %v1602
      %v1604 = vadd.f32 %v1573, 1.0
      %v1605 = vlog2.pop %v1604
      %v1606 = vmul.f32 %v1605, 0.6931472
      %v1607 = vmul.f32 -0.5, %v1573
      %v1608 = vadd.f32 %v1607, 1.0
      %v1609 = vmul.f32 %v1608, %v1573
      %v1610 = vand.u32 2147483647, %v1573
      %vm1611 = vcmp.lt.f32.partialorder %v1610, 0.0004427343
      %v1612 = vsel %vm1611, %v1609, %v1606
      %v1613 = vadd.f32 %v1575, 1.0
      %v1614 = vlog2.pop %v1613
      %v1615 = vmul.f32 %v1614, 0.6931472
      %v1616 = vmul.f32 -0.5, %v1575
      %v1617 = vadd.f32 %v1616, 1.0
      %v1618 = vmul.f32 %v1617, %v1575
      %v1619 = vand.u32 2147483647, %v1575
      %vm1620 = vcmp.lt.f32.partialorder %v1619, 0.0004427343
      %v1621 = vsel %vm1620, %v1618, %v1615
      %v1622 = vadd.f32 %v1577, 1.0
      %v1623 = vlog2.pop %v1622
      %v1624 = vmul.f32 %v1623, 0.6931472
      %v1625 = vmul.f32 -0.5, %v1577
      %v1626 = vadd.f32 %v1625, 1.0
      %v1627 = vmul.f32 %v1626, %v1577
      %v1628 = vand.u32 2147483647, %v1577
      %vm1629 = vcmp.lt.f32.partialorder %v1628, 0.0004427343
      %v1630 = vsel %vm1629, %v1627, %v1624
      %v1631 = vadd.f32 %v1579, 1.0
      %v1632 = vlog2.pop %v1631
      %v1633 = vmul.f32 %v1632, 0.6931472
      %v1634 = vmul.f32 -0.5, %v1579
      %v1635 = vadd.f32 %v1634, 1.0
      %v1636 = vmul.f32 %v1635, %v1579
      %v1637 = vand.u32 2147483647, %v1579
      %vm1638 = vcmp.lt.f32.partialorder %v1637, 0.0004427343
      %v1639 = vsel %vm1638, %v1636, %v1633
      %v1640 = vadd.f32 %v1581, 1.0
      %v1641 = vlog2.pop %v1640
      %v1642 = vmul.f32 %v1641, 0.6931472
      %v1643 = vmul.f32 -0.5, %v1581
      %v1644 = vadd.f32 %v1643, 1.0
      %v1645 = vmul.f32 %v1644, %v1581
      %v1646 = vand.u32 2147483647, %v1581
      %vm1647 = vcmp.lt.f32.partialorder %v1646, 0.0004427343
      %v1648 = vsel %vm1647, %v1645, %v1642
      %v1649 = vadd.f32 %v1583, 1.0
      %v1650 = vlog2.pop %v1649
      %v1651 = vmul.f32 %v1650, 0.6931472
      %v1652 = vmul.f32 -0.5, %v1583
      %v1653 = vadd.f32 %v1652, 1.0
      %v1654 = vmul.f32 %v1653, %v1583
      %v1655 = vand.u32 2147483647, %v1583
      %vm1656 = vcmp.lt.f32.partialorder %v1655, 0.0004427343
      %v1657 = vsel %vm1656, %v1654, %v1651
      %v1658 = vadd.f32 %v1585, 1.0
      %v1659 = vlog2.pop %v1658
      %v1660 = vmul.f32 %v1659, 0.6931472
      %v1661 = vmul.f32 -0.5, %v1585
      %v1662 = vadd.f32 %v1661, 1.0
      %v1663 = vmul.f32 %v1662, %v1585
      %v1664 = vand.u32 2147483647, %v1585
      %vm1665 = vcmp.lt.f32.partialorder %v1664, 0.0004427343
      %v1666 = vsel %vm1665, %v1663, %v1660
      %v1667 = vadd.f32 %v1587, 1.0
      %v1668 = vlog2.pop %v1667
      %v1669 = vmul.f32 %v1668, 0.6931472
      %v1670 = vmul.f32 -0.5, %v1587
      %v1671 = vadd.f32 %v1670, 1.0
      %v1672 = vmul.f32 %v1671, %v1587
      %v1673 = vand.u32 2147483647, %v1587
      %vm1674 = vcmp.lt.f32.partialorder %v1673, 0.0004427343
      %v1675 = vsel %vm1674, %v1672, %v1669
      %v1676 = vadd.f32 %v1589, 1.0
      %v1677 = vlog2.pop %v1676
      %v1678 = vmul.f32 %v1677, 0.6931472
      %v1679 = vmul.f32 -0.5, %v1589
      %v1680 = vadd.f32 %v1679, 1.0
      %v1681 = vmul.f32 %v1680, %v1589
      %v1682 = vand.u32 2147483647, %v1589
      %vm1683 = vcmp.lt.f32.partialorder %v1682, 0.0004427343
      %v1684 = vsel %vm1683, %v1681, %v1678
      %v1685 = vadd.f32 %v1591, 1.0
      %v1686 = vlog2.pop %v1685
      %v1687 = vmul.f32 %v1686, 0.6931472
      %v1688 = vmul.f32 -0.5, %v1591
      %v1689 = vadd.f32 %v1688, 1.0
      %v1690 = vmul.f32 %v1689, %v1591
      %v1691 = vand.u32 2147483647, %v1591
      %vm1692 = vcmp.lt.f32.partialorder %v1691, 0.0004427343
      %v1693 = vsel %vm1692, %v1690, %v1687
      %v1694 = vadd.f32 %v1593, 1.0
      %v1695 = vlog2.pop %v1694
      %v1696 = vmul.f32 %v1695, 0.6931472
      %v1697 = vmul.f32 -0.5, %v1593
      %v1698 = vadd.f32 %v1697, 1.0
      %v1699 = vmul.f32 %v1698, %v1593
      %v1700 = vand.u32 2147483647, %v1593
      %vm1701 = vcmp.lt.f32.partialorder %v1700, 0.0004427343
      %v1702 = vsel %vm1701, %v1699, %v1696
      %v1703 = vadd.f32 %v1595, 1.0
      %v1704 = vlog2.pop %v1703
      %v1705 = vmul.f32 %v1704, 0.6931472
      %v1706 = vmul.f32 -0.5, %v1595
      %v1707 = vadd.f32 %v1706, 1.0
      %v1708 = vmul.f32 %v1707, %v1595
      %v1709 = vand.u32 2147483647, %v1595
      %vm1710 = vcmp.lt.f32.partialorder %v1709, 0.0004427343
      %v1711 = vsel %vm1710, %v1708, %v1705
      %v1712 = vadd.f32 %v1597, 1.0
      %v1713 = vlog2.pop %v1712
      %v1714 = vmul.f32 %v1713, 0.6931472
      %v1715 = vmul.f32 -0.5, %v1597
      %v1716 = vadd.f32 %v1715, 1.0
      %v1717 = vmul.f32 %v1716, %v1597
      %v1718 = vand.u32 2147483647, %v1597
      %vm1719 = vcmp.lt.f32.partialorder %v1718, 0.0004427343
      %v1720 = vsel %vm1719, %v1717, %v1714
      %v1721 = vadd.f32 %v1599, 1.0
      %v1722 = vlog2.pop %v1721
      %v1723 = vmul.f32 %v1722, 0.6931472
      %v1724 = vmul.f32 -0.5, %v1599
      %v1725 = vadd.f32 %v1724, 1.0
      %v1726 = vmul.f32 %v1725, %v1599
      %v1727 = vand.u32 2147483647, %v1599
      %vm1728 = vcmp.lt.f32.partialorder %v1727, 0.0004427343
      %v1729 = vsel %vm1728, %v1726, %v1723
      %v1730 = vadd.f32 %v1601, 1.0
      %v1731 = vlog2.pop %v1730
      %v1732 = vmul.f32 %v1731, 0.6931472
      %v1733 = vmul.f32 -0.5, %v1601
      %v1734 = vadd.f32 %v1733, 1.0
      %v1735 = vmul.f32 %v1734, %v1601
      %v1736 = vand.u32 2147483647, %v1601
      %vm1737 = vcmp.lt.f32.partialorder %v1736, 0.0004427343
      %v1738 = vsel %vm1737, %v1735, %v1732
      %v1739 = vadd.f32 %v1603, 1.0
      %v1740 = vlog2.pop %v1739
      %v1741 = vmul.f32 %v1740, 0.6931472
      %v1742 = vmul.f32 -0.5, %v1603
      %v1743 = vadd.f32 %v1742, 1.0
      %v1744 = vmul.f32 %v1743, %v1603
      %v1745 = vand.u32 2147483647, %v1603
      %vm1746 = vcmp.lt.f32.partialorder %v1745, 0.0004427343
      %v1747 = vsel %vm1746, %v1744, %v1741
      %v1748 = vadd.f32 %v1492, %v1612
      %v1749 = vadd.f32 %v1493, %v1621
      %v1750 = vadd.f32 %v1494, %v1630
      %v1751 = vadd.f32 %v1495, %v1639
      %v1752 = vadd.f32 %v1496, %v1648
      %v1753 = vadd.f32 %v1497, %v1657
      %v1754 = vadd.f32 %v1498, %v1666
      %v1755 = vadd.f32 %v1499, %v1675
      %v1756 = vadd.f32 %v1500, %v1684
      %v1757 = vadd.f32 %v1501, %v1693
      %v1758 = vadd.f32 %v1502, %v1702
      %v1759 = vadd.f32 %v1503, %v1711
      %v1760 = vadd.f32 %v1504, %v1720
      %v1761 = vadd.f32 %v1505, %v1729
      %v1762 = vadd.f32 %v1506, %v1738
      %v1763 = vadd.f32 %v1507, %v1747
      %v1764 = vsel %vm1508, %v1524, %v1748
      %v1765 = vsel %vm1509, %v1525, %v1749
      %v1766 = vsel %vm1510, %v1526, %v1750
      %v1767 = vsel %vm1511, %v1527, %v1751
      %v1768 = vsel %vm1512, %v1528, %v1752
      %v1769 = vsel %vm1513, %v1529, %v1753
      %v1770 = vsel %vm1514, %v1530, %v1754
      %v1771 = vsel %vm1515, %v1531, %v1755
      %v1772 = vsel %vm1516, %v1532, %v1756
      %v1773 = vsel %vm1517, %v1533, %v1757
      %v1774 = vsel %vm1518, %v1534, %v1758
      %v1775 = vsel %vm1519, %v1535, %v1759
      %v1776 = vsel %vm1520, %v1536, %v1760
      %v1777 = vsel %vm1521, %v1537, %v1761
      %v1778 = vsel %vm1522, %v1538, %v1762
      %v1779 = vsel %vm1523, %v1539, %v1763
      %v1780 = vsub.f32 %v1460, %v1764
      %v1781 = vsub.f32 %v1461, %v1765
      %v1782 = vsub.f32 %v1462, %v1766
      %v1783 = vsub.f32 %v1463, %v1767
      %v1784 = vsub.f32 %v1464, %v1768
      %v1785 = vsub.f32 %v1465, %v1769
      %v1786 = vsub.f32 %v1466, %v1770
      %v1787 = vsub.f32 %v1467, %v1771
      %v1788 = vsub.f32 %v1468, %v1772
      %v1789 = vsub.f32 %v1469, %v1773
      %v1790 = vsub.f32 %v1470, %v1774
      %v1791 = vsub.f32 %v1471, %v1775
      %v1792 = vsub.f32 %v1472, %v1776
      %v1793 = vsub.f32 %v1473, %v1777
      %v1794 = vsub.f32 %v1474, %v1778
      %v1795 = vsub.f32 %v1475, %v1779
      %v1796 = vmul.f32 %v1780, 2.0
      %v1797 = vmul.f32 %v1781, 2.0
      %v1798 = vmul.f32 %v1782, 2.0
      %v1799 = vmul.f32 %v1783, 2.0
      %v1800 = vmul.f32 %v1784, 2.0
      %v1801 = vmul.f32 %v1785, 2.0
      %v1802 = vmul.f32 %v1786, 2.0
      %v1803 = vmul.f32 %v1787, 2.0
      %v1804 = vmul.f32 %v1788, 2.0
      %v1805 = vmul.f32 %v1789, 2.0
      %v1806 = vmul.f32 %v1790, 2.0
      %v1807 = vmul.f32 %v1791, 2.0
      %v1808 = vmul.f32 %v1792, 2.0
      %v1809 = vmul.f32 %v1793, 2.0
      %v1810 = vmul.f32 %v1794, 2.0
      %v1811 = vmul.f32 %v1795, 2.0
      %v1812 = vmul.f32 %v1268, -0.5
      %v1813 = vmul.f32 %v1269, -0.5
      %v1814 = vmul.f32 %v1270, -0.5
      %v1815 = vmul.f32 %v1271, -0.5
      %v1816 = vmul.f32 %v1272, -0.5
      %v1817 = vmul.f32 %v1273, -0.5
      %v1818 = vmul.f32 %v1274, -0.5
      %v1819 = vmul.f32 %v1275, -0.5
      %v1820 = vmul.f32 %v1276, -0.5
      %v1821 = vmul.f32 %v1277, -0.5
      %v1822 = vmul.f32 %v1278, -0.5
      %v1823 = vmul.f32 %v1279, -0.5
      %v1824 = vmul.f32 %v1280, -0.5
      %v1825 = vmul.f32 %v1281, -0.5
      %v1826 = vmul.f32 %v1282, -0.5
      %v1827 = vmul.f32 %v1283, -0.5
      %v1828 = vmul.f32 %v1812, %v1268
      %v1829 = vmul.f32 %v1813, %v1269
      %v1830 = vmul.f32 %v1814, %v1270
      %v1831 = vmul.f32 %v1815, %v1271
      %v1832 = vmul.f32 %v1816, %v1272
      %v1833 = vmul.f32 %v1817, %v1273
      %v1834 = vmul.f32 %v1818, %v1274
      %v1835 = vmul.f32 %v1819, %v1275
      %v1836 = vmul.f32 %v1820, %v1276
      %v1837 = vmul.f32 %v1821, %v1277
      %v1838 = vmul.f32 %v1822, %v1278
      %v1839 = vmul.f32 %v1823, %v1279
      %v1840 = vmul.f32 %v1824, %v1280
      %v1841 = vmul.f32 %v1825, %v1281
      %v1842 = vmul.f32 %v1826, %v1282
      %v1843 = vmul.f32 %v1827, %v1283
      %1860 = vrot.lane.b32.xlu0 %v1220, 120
      %v1861 = vpop.permute.xlu0 %1860
      %1862 = vrot.lane.b32.xlu0 %v1221, 120
      %v1863 = vpop.permute.xlu0 %1862
      %1864 = vrot.lane.b32.xlu0 %v1222, 120
      %v1865 = vpop.permute.xlu0 %1864
      %1866 = vrot.lane.b32.xlu0 %v1223, 120
      %v1867 = vpop.permute.xlu0 %1866
      %1868 = vrot.lane.b32.xlu0 %v1224, 120
      %v1869 = vpop.permute.xlu0 %1868
      %1870 = vrot.lane.b32.xlu0 %v1225, 120
      %v1871 = vpop.permute.xlu0 %1870
      %1872 = vrot.lane.b32.xlu0 %v1226, 120
      %v1873 = vpop.permute.xlu0 %1872
      %1874 = vrot.lane.b32.xlu0 %v1227, 120
      %v1875 = vpop.permute.xlu0 %1874
      %1876 = vrot.lane.b32.xlu0 %v1228, 120
      %v1877 = vpop.permute.xlu0 %1876
      %1878 = vrot.lane.b32.xlu0 %v1229, 120
      %v1879 = vpop.permute.xlu0 %1878
      %1880 = vrot.lane.b32.xlu0 %v1230, 120
      %v1881 = vpop.permute.xlu0 %1880
      %1882 = vrot.lane.b32.xlu0 %v1231, 120
      %v1883 = vpop.permute.xlu0 %1882
      %1884 = vrot.lane.b32.xlu0 %v1232, 120
      %v1885 = vpop.permute.xlu0 %1884
      %1886 = vrot.lane.b32.xlu0 %v1233, 120
      %v1887 = vpop.permute.xlu0 %1886
      %1888 = vrot.lane.b32.xlu0 %v1234, 120
      %v1889 = vpop.permute.xlu0 %1888
      %1890 = vrot.lane.b32.xlu0 %v1235, 120
      %v1891 = vpop.permute.xlu0 %1890
      %v1908 = vsub.f32 %v1828, %v1861
      %v1909 = vsub.f32 %v1829, %v1863
      %v1910 = vsub.f32 %v1830, %v1865
      %v1911 = vsub.f32 %v1831, %v1867
      %v1912 = vsub.f32 %v1832, %v1869
      %v1913 = vsub.f32 %v1833, %v1871
      %v1914 = vsub.f32 %v1834, %v1873
      %v1915 = vsub.f32 %v1835, %v1875
      %v1916 = vsub.f32 %v1836, %v1877
      %v1917 = vsub.f32 %v1837, %v1879
      %v1918 = vsub.f32 %v1838, %v1881
      %v1919 = vsub.f32 %v1839, %v1883
      %v1920 = vsub.f32 %v1840, %v1885
      %v1921 = vsub.f32 %v1841, %v1887
      %v1922 = vsub.f32 %v1842, %v1889
      %v1923 = vsub.f32 %v1843, %v1891
      %v1924 = vsub.f32 %v1908, 0.9189385
      %v1925 = vsub.f32 %v1909, 0.9189385
      %v1926 = vsub.f32 %v1910, 0.9189385
      %v1927 = vsub.f32 %v1911, 0.9189385
      %v1928 = vsub.f32 %v1912, 0.9189385
      %v1929 = vsub.f32 %v1913, 0.9189385
      %v1930 = vsub.f32 %v1914, 0.9189385
      %v1931 = vsub.f32 %v1915, 0.9189385
      %v1932 = vsub.f32 %v1916, 0.9189385
      %v1933 = vsub.f32 %v1917, 0.9189385
      %v1934 = vsub.f32 %v1918, 0.9189385
      %v1935 = vsub.f32 %v1919, 0.9189385
      %v1936 = vsub.f32 %v1920, 0.9189385
      %v1937 = vsub.f32 %v1921, 0.9189385
      %v1938 = vsub.f32 %v1922, 0.9189385
      %v1939 = vsub.f32 %v1923, 0.9189385
      %v1940 = vsub.f32 %v1924, %v1796
      %v1941 = vsub.f32 %v1925, %v1797
      %v1942 = vsub.f32 %v1926, %v1798
      %v1943 = vsub.f32 %v1927, %v1799
      %v1944 = vsub.f32 %v1928, %v1800
      %v1945 = vsub.f32 %v1929, %v1801
      %v1946 = vsub.f32 %v1930, %v1802
      %v1947 = vsub.f32 %v1931, %v1803
      %v1948 = vsub.f32 %v1932, %v1804
      %v1949 = vsub.f32 %v1933, %v1805
      %v1950 = vsub.f32 %v1934, %v1806
      %v1951 = vsub.f32 %v1935, %v1807
      %v1952 = vsub.f32 %v1936, %v1808
      %v1953 = vsub.f32 %v1937, %v1809
      %v1954 = vsub.f32 %v1938, %v1810
      %v1955 = vsub.f32 %v1939, %v1811
      %vm1956 = vcmask 64512
      %1957 = vst.msk [vmem:[%s364] sm:$0xff] %vm1956, %v1444
      %1958 = vst.msk [vmem:[%s364 + $0x8] sm:$0xff] %vm1956, %v1445
      %1959 = vst.msk [vmem:[%s364 + $0x10] sm:$0xff] %vm1956, %v1446
      %1960 = vst.msk [vmem:[%s364 + $0x18] sm:$0xff] %vm1956, %v1447
      %1961 = vst.msk [vmem:[%s364 + $0x20] sm:$0xff] %vm1956, %v1448
      %1962 = vst.msk [vmem:[%s364 + $0x28] sm:$0xff] %vm1956, %v1449
      %1963 = vst.msk [vmem:[%s364 + $0x30] sm:$0xff] %vm1956, %v1450
      %1964 = vst.msk [vmem:[%s364 + $0x38] sm:$0xff] %vm1956, %v1451
      %1965 = vst.msk [vmem:[%s364 + $0x40] sm:$0xff] %vm1956, %v1452
      %1966 = vst.msk [vmem:[%s364 + $0x48] sm:$0xff] %vm1956, %v1453
      %1967 = vst.msk [vmem:[%s364 + $0x50] sm:$0xff] %vm1956, %v1454
      %1968 = vst.msk [vmem:[%s364 + $0x58] sm:$0xff] %vm1956, %v1455
      %1969 = vst.msk [vmem:[%s364 + $0x60] sm:$0xff] %vm1956, %v1456
      %1970 = vst.msk [vmem:[%s364 + $0x68] sm:$0xff] %vm1956, %v1457
      %1971 = vst.msk [vmem:[%s364 + $0x70] sm:$0xff] %vm1956, %v1458
      %1972 = vst.msk [vmem:[%s364 + $0x78] sm:$0xff] %vm1956, %v1459
      %v1973 = vsel %vm1956, %v1940, 0.0
      %1974 = vadd.xlane.f32.xlu0 %v1973
      %v1975 = vpop.xlane.xlu0 %1974
      %v1976 = vsel %vm1956, %v1941, 0.0
      %1977 = vadd.xlane.f32.xlu0 %v1976
      %v1978 = vpop.xlane.xlu0 %1977
      %v1979 = vsel %vm1956, %v1942, 0.0
      %1980 = vadd.xlane.f32.xlu0 %v1979
      %v1981 = vpop.xlane.xlu0 %1980
      %v1982 = vsel %vm1956, %v1943, 0.0
      %1983 = vadd.xlane.f32.xlu0 %v1982
      %v1984 = vpop.xlane.xlu0 %1983
      %v1985 = vsel %vm1956, %v1944, 0.0
      %1986 = vadd.xlane.f32.xlu0 %v1985
      %v1987 = vpop.xlane.xlu0 %1986
      %v1988 = vsel %vm1956, %v1945, 0.0
      %1989 = vadd.xlane.f32.xlu0 %v1988
      %v1990 = vpop.xlane.xlu0 %1989
      %v1991 = vsel %vm1956, %v1946, 0.0
      %1992 = vadd.xlane.f32.xlu0 %v1991
      %v1993 = vpop.xlane.xlu0 %1992
      %v1994 = vsel %vm1956, %v1947, 0.0
      %1995 = vadd.xlane.f32.xlu0 %v1994
      %v1996 = vpop.xlane.xlu0 %1995
      %v1997 = vsel %vm1956, %v1948, 0.0
      %1998 = vadd.xlane.f32.xlu0 %v1997
      %v1999 = vpop.xlane.xlu0 %1998
      %v2000 = vsel %vm1956, %v1949, 0.0
      %2001 = vadd.xlane.f32.xlu0 %v2000
      %v2002 = vpop.xlane.xlu0 %2001
      %v2003 = vsel %vm1956, %v1950, 0.0
      %2004 = vadd.xlane.f32.xlu0 %v2003
      %v2005 = vpop.xlane.xlu0 %2004
      %v2006 = vsel %vm1956, %v1951, 0.0
      %2007 = vadd.xlane.f32.xlu0 %v2006
      %v2008 = vpop.xlane.xlu0 %2007
      %v2009 = vsel %vm1956, %v1952, 0.0
      %2010 = vadd.xlane.f32.xlu0 %v2009
      %v2011 = vpop.xlane.xlu0 %2010
      %v2012 = vsel %vm1956, %v1953, 0.0
      %2013 = vadd.xlane.f32.xlu0 %v2012
      %v2014 = vpop.xlane.xlu0 %2013
      %v2015 = vsel %vm1956, %v1954, 0.0
      %2016 = vadd.xlane.f32.xlu0 %v2015
      %v2017 = vpop.xlane.xlu0 %2016
      %v2018 = vsel %vm1956, %v1955, 0.0
      %2019 = vadd.xlane.f32.xlu0 %v2018
      %v2020 = vpop.xlane.xlu0 %2019
      %vm2021 = vcmask 7168
      %2022 = vst.msk [vmem:[%s370] sm:$0xff] %vm2021, %v1975
      %2023 = vst.msk [vmem:[%s370 + $0x8] sm:$0xff] %vm2021, %v1978
      %2024 = vst.msk [vmem:[%s370 + $0x10] sm:$0xff] %vm2021, %v1981
      %2025 = vst.msk [vmem:[%s370 + $0x18] sm:$0xff] %vm2021, %v1984
      %2026 = vst.msk [vmem:[%s370 + $0x20] sm:$0xff] %vm2021, %v1987
      %2027 = vst.msk [vmem:[%s370 + $0x28] sm:$0xff] %vm2021, %v1990
      %2028 = vst.msk [vmem:[%s370 + $0x30] sm:$0xff] %vm2021, %v1993
      %2029 = vst.msk [vmem:[%s370 + $0x38] sm:$0xff] %vm2021, %v1996
      %2030 = vst.msk [vmem:[%s370 + $0x40] sm:$0xff] %vm2021, %v1999
      %2031 = vst.msk [vmem:[%s370 + $0x48] sm:$0xff] %vm2021, %v2002
      %2032 = vst.msk [vmem:[%s370 + $0x50] sm:$0xff] %vm2021, %v2005
      %2033 = vst.msk [vmem:[%s370 + $0x58] sm:$0xff] %vm2021, %v2008
      %2034 = vst.msk [vmem:[%s370 + $0x60] sm:$0xff] %vm2021, %v2011
      %2035 = vst.msk [vmem:[%s370 + $0x68] sm:$0xff] %vm2021, %v2014
      %2036 = vst.msk [vmem:[%s370 + $0x70] sm:$0xff] %vm2021, %v2017
      %2037 = vst.msk [vmem:[%s370 + $0x78] sm:$0xff] %vm2021, %v2020
      %s2038 = smul.u32 16, %s21
      %p2039 = scmp.lt.s32.totalorder %s2038, 31
      %s2040 = scalar_select %p2039, %s2038, 31
      %s2041 = smul.addr %s2040, 8
      %s2042 = scalar_lea.vmem %s8, %s2041
      %s2043 = smul.u32 16, %s21
      %p2044 = scmp.lt.s32.totalorder %s2043, 31
      %s2045 = scalar_select %p2044, %s2043, 31
      %s2046 = smul.addr %s2045, 8
      %s2047 = scalar_lea.vmem %s9, %s2046
      // Predicated region
      $region53: #{actor_forward.1} parent=51 // pred_check
        %p2048 = pneg %p217
      $region54: #{actor_forward.1} parent=51 // pred_check_branch
        %2050 = sbr.rel (%p2048) target = $region56
      $region55: #{actor_forward.1} parent=51 // pred_region
        %s2051 = smul.u32 16, %s21
      $region56: #{actor_forward.1} parent=51 // pred_fallthru
        _
      // Predicated region
      $region57: #{actor_forward.1} parent=51 // pred_check
        %p2052 = pneg %p243
      $region58: #{actor_forward.1} parent=51 // pred_check_branch
        %2054 = sbr.rel (%p2052) target = $region60
      $region59: #{actor_forward.1} parent=51 // pred_region
        %s2055 = smul.u32 16, %s21
      $region60: #{actor_forward.1} parent=51 // pred_fallthru
        _
    $region52: #{actor_forward.1} parent=5 // pred_fallthru
      _
    %p2056 = scmp.le.s32.totalorder 2, %s16
    // Predicated region
    $region61: #{actor_forward.1} parent=5 // pred_check
      %p2057 = pneg %p2056
    $region62: #{actor_forward.1} parent=5 // pred_check_branch
      %2059 = sbr.rel (%p2057) target = $region64
    $region63: #{actor_forward.1} parent=5 // pred_region
      %s2060 = ssub.s32 %s16, 2
      // Predicated region
      $region65: #{actor_forward.1} parent=63 // pred_check
        %p2061 = pneg %p223
      $region66: #{actor_forward.1} parent=63 // pred_check_branch
        %2063 = sbr.rel (%p2061) target = $region68
      $region67: #{actor_forward.1} parent=63 // pred_region
        %s2064 = smul.u32 16, %s22
        %p2065 = scmp.lt.s32.totalorder %s2064, 31
        %s2066 = scalar_select %p2065, %s2064, 31
        %s2067 = smul.addr %s2066, 8
        %s2068 = scalar_lea.vmem %s8, %s2067
      $region68: #{actor_forward.1} parent=63 // pred_fallthru
        _
      // Predicated region
      $region69: #{actor_forward.1} parent=63 // pred_check
        %p2069 = pneg %p249
      $region70: #{actor_forward.1} parent=63 // pred_check_branch
        %2071 = sbr.rel (%p2069) target = $region72
      $region71: #{actor_forward.1} parent=63 // pred_region
        %s2072 = smul.u32 16, %s22
        %p2073 = scmp.lt.s32.totalorder %s2072, 31
        %s2074 = scalar_select %p2073, %s2072, 31
        %s2075 = smul.addr %s2074, 8
        %s2076 = scalar_lea.vmem %s9, %s2075
      $region72: #{actor_forward.1} parent=63 // pred_fallthru
        _
    $region64: #{actor_forward.1} parent=5 // pred_fallthru
      _
  $region6: #{actor_forward.1} parent=0 // loop_footer
    %s20 = sadd.s32 1, %s16
  $region7: #{actor_forward.1} parent=0 // loop_footer_branch
    %15 = sbr.rel target = $region3
  $region8: #{actor_forward.1} parent=0 // loop_exit
    _

</llo_original>
